<compile_context>
chip_gen: v7x
topology: tpu7x:2x2x1
jax: 0.10.0
libtpu: 0.0.40
codegen_flags: <defaults>
</compile_context>

<pallas_src>
import functools

import jax
import jax.numpy as jnp
from jax.experimental import pallas as pl
from jax.experimental.pallas import tpu as pltpu

PAD_ID = 40478          # hard-coded in the PyTorch forward: lengths = (x != 40478).sum(dim=1)
VOCAB_SIZE = PAD_ID + 1  # pad id stays a valid embedding index
EMBED_DIM = 16
HIDDEN_DIM = 32
ACTION_DIM = 8
BATCH = 2
SEQ = 8


def _round8(n):
    return ((n + 7) // 8) * 8


def _slab_layout(embed_dim, hidden_dim):
    """Row offsets of each parameter segment inside the packed (rows, 8H) slab."""
    x_width = 2 * embed_dim + 2 * hidden_dim   # act-slab width: emb_f | emb_rev | mask
    off = {}
    r = 0
    for name, rows in (("w_in", x_width),        # (X, 8H)  input proj (zero rows for mask cols)
                       ("b_all", 1),             # (1, 8H)  b_ih + b_hh, both directions
                       ("w_hh", 2 * hidden_dim), # (2H, 8H) block-diag recurrent weights
                       ("w1", 2 * hidden_dim),   # (2H, 8H) fc1^T in cols 0:H
                       ("b1", 1),
                       ("w2", hidden_dim),       # (H, 8H)  fc2^T in cols 0:A
                       ("b2", 1)):
        off[name] = r
        r += _round8(rows)
    off["_rows"] = r
    return off, x_width


def _actor_kernel(act_ref, w_ref, out_ref, *, B, T, E, H, A, off):
    """Single-program kernel: whole problem (<0.5 MiB) lives in VMEM."""
    H2, H4, H8 = 2 * H, 4 * H, 8 * H
    X = 2 * E + 2 * H

    w_in = w_ref[off["w_in"]:off["w_in"] + X, :]        # (X, 8H)
    b_all = w_ref[off["b_all"]:off["b_all"] + 1, :]     # (1, 8H)
    w_hh = w_ref[off["w_hh"]:off["w_hh"] + H2, :]       # (2H, 8H)

    # Hoisted input projection: all T steps, both directions, one MXU call.
    # act rows are time-major (t*B + b); the mask columns hit zero weight rows.
    gates_in = jnp.dot(act_ref[...], w_in,
                       preferred_element_type=jnp.float32) + b_all   # (T*B, 8H)

    h = jnp.zeros((B, H2), jnp.float32)   # [h_fwd | h_bwd]
    c = jnp.zeros((B, H2), jnp.float32)

    # Fused, fully-unrolled recurrence: iteration s advances the forward
    # direction at time step s and the backward direction at step T-1-s (the
    # reversed embeddings already live in the act slab) with ONE matmul/step.
    for s in range(T):
        g = gates_in[s * B:(s + 1) * B, :] + jnp.dot(
            h, w_hh, preferred_element_type=jnp.float32)             # (B, 8H)
        # gate column order: [i_f i_b | f_f f_b | g_f g_b | o_f o_b]
        if_g = jax.nn.sigmoid(g[:, 0:H4])          # i|f slab, one EUP push
        g_g = jnp.tanh(g[:, H4:H4 + H2])
        o_g = jax.nn.sigmoid(g[:, H4 + H2:H8])
        c_new = if_g[:, H2:H4] * c + if_g[:, 0:H2] * g_g
        h_new = o_g * jnp.tanh(c_new)
        # pack_padded_sequence semantics: padded steps never update the state.
        m = act_ref[s * B:(s + 1) * B, 2 * E:2 * E + H2]              # (B, 2H) {0,1}
        h = h + m * (h_new - h)
        c = c + m * (c_new - c)

    # fc head: h is already [h_fwd | h_bwd] == torch.cat(hidden[-2], hidden[-1]).
    w1 = w_ref[off["w1"]:off["w1"] + H2, 0:H]
    b1 = w_ref[off["b1"]:off["b1"] + 1, 0:H]
    w2 = w_ref[off["w2"]:off["w2"] + H, 0:A]
    b2 = w_ref[off["b2"]:off["b2"] + 1, 0:A]

    z = jnp.maximum(jnp.dot(h, w1, preferred_element_type=jnp.float32) + b1, 0.0)
    logits = jnp.dot(z, w2, preferred_element_type=jnp.float32) + b2

    mx = jnp.max(logits, axis=-1, keepdims=True)
    e = jnp.exp(logits - mx)
    denom = jnp.sum(e, axis=-1, keepdims=True)
    out_ref[...] = e * pl.reciprocal(denom, approx=False)


def init_params(key, vocab_size, embed_dim, hidden_dim, action_dim):
    ks = jax.random.split(key, 16)
    k = 1.0 / jnp.sqrt(hidden_dim)

    def unif(kk, shape, bound):
        return jax.random.uniform(kk, shape, jnp.float32, -bound, bound)

    return {
        "embedding": jax.random.normal(ks[0], (vocab_size, embed_dim), jnp.float32),
        # forward direction
        "w_ih_f": unif(ks[1], (4 * hidden_dim, embed_dim), k),
        "w_hh_f": unif(ks[2], (4 * hidden_dim, hidden_dim), k),
        "b_ih_f": unif(ks[3], (4 * hidden_dim,), k),
        "b_hh_f": unif(ks[4], (4 * hidden_dim,), k),
        # backward direction
        "w_ih_b": unif(ks[5], (4 * hidden_dim, embed_dim), k),
        "w_hh_b": unif(ks[6], (4 * hidden_dim, hidden_dim), k),
        "b_ih_b": unif(ks[7], (4 * hidden_dim,), k),
        "b_hh_b": unif(ks[8], (4 * hidden_dim,), k),
        # fc head
        "w1": unif(ks[9], (hidden_dim, 2 * hidden_dim), 1.0 / jnp.sqrt(2 * hidden_dim)),
        "b1": unif(ks[10], (hidden_dim,), 1.0 / jnp.sqrt(2 * hidden_dim)),
        "w2": unif(ks[11], (action_dim, hidden_dim), k),
        "b2": unif(ks[12], (action_dim,), k),
    }


def _interleave_gates(a_fwd, a_bwd, H):
    """(..., 4H) fwd + (..., 4H) bwd in [i,f,g,o] order -> (..., 8H) interleaved."""
    pieces = []
    for g in range(4):
        pieces.append(a_fwd[..., g * H:(g + 1) * H])
        pieces.append(a_bwd[..., g * H:(g + 1) * H])
    return jnp.concatenate(pieces, axis=-1)


def prepare_params(params):
    """One-time packing: transposes, bias folding, block-diag W_hh, one slab."""
    E, H = EMBED_DIM, HIDDEN_DIM
    off, _ = _slab_layout(E, H)
    H8 = 8 * H
    f32 = jnp.float32

    wih_f = params["w_ih_f"].T.astype(f32)   # (E, 4H)
    wih_b = params["w_ih_b"].T.astype(f32)
    whh_f = params["w_hh_f"].T.astype(f32)   # (H, 4H)
    whh_b = params["w_hh_b"].T.astype(f32)
    zE = jnp.zeros((E, 4 * H), f32)
    zH = jnp.zeros((H, 4 * H), f32)

    # combined input projection (rows: emb_fwd | emb_rev), plus zero rows so the
    # mask columns of the activation slab can go through the same matmul.
    w_in = _interleave_gates(jnp.concatenate([wih_f, zE], axis=0),
                             jnp.concatenate([zE, wih_b], axis=0), H)     # (2E, 8H)
    w_in_ext = jnp.concatenate([w_in, jnp.zeros((2 * H, H8), f32)], axis=0)

    b_all = _interleave_gates((params["b_ih_f"] + params["b_hh_f"]).reshape(1, -1),
                              (params["b_ih_b"] + params["b_hh_b"]).reshape(1, -1), H)

    # block-diagonal recurrent weights: [h_f | h_b] (2H) -> interleaved gates (8H)
    w_hh = _interleave_gates(jnp.concatenate([whh_f, zH], axis=0),
                             jnp.concatenate([zH, whh_b], axis=0), H)     # (2H, 8H)

    def pad_cols(a):
        a = a.astype(f32)
        return jnp.pad(a, ((0, 0), (0, H8 - a.shape[1])))

    segs = {
        "w_in": w_in_ext,
        "b_all": b_all.astype(f32),
        "w_hh": w_hh,
        "w1": pad_cols(params["w1"].T),               # (2H, H) in cols 0:H
        "b1": pad_cols(params["b1"].reshape(1, -1)),
        "w2": pad_cols(params["w2"].T),               # (H, A) in cols 0:A
        "b2": pad_cols(params["b2"].reshape(1, -1)),
    }
    slab = jnp.zeros((off["_rows"], H8), f32)
    for name, seg in segs.items():
        slab = slab.at[off[name]:off[name] + seg.shape[0], :].set(seg)
    return {"embedding": params["embedding"].astype(f32), "slab": slab}


@jax.jit
def actor_forward(x_tokens, embedding, slab):
    B, T = x_tokens.shape
    E, H, A = EMBED_DIM, HIDDEN_DIM, ACTION_DIM
    off, X = _slab_layout(E, H)

    # Embedding gather directly in time-major order; the reversed copy feeds the
    # backward direction so the kernel advances both directions per iteration.
    emb_tm = jnp.take(embedding, x_tokens.T, axis=0)          # (T, B, E)
    emb_rev = emb_tm[::-1]

    lengths = jnp.sum(x_tokens != PAD_ID, axis=1).astype(jnp.int32)     # (B,)
    t_idx = jnp.arange(T, dtype=jnp.int32)[:, None]
    m_fwd = (t_idx < lengths[None, :]).astype(jnp.float32)              # (T, B)
    m_bwd = ((T - 1 - t_idx) < lengths[None, :]).astype(jnp.float32)
    mask = jnp.concatenate(
        [jnp.broadcast_to(m_fwd[:, :, None], (T, B, H)),
         jnp.broadcast_to(m_bwd[:, :, None], (T, B, H))], axis=-1)      # (T, B, 2H)

    act = jnp.concatenate([emb_tm, emb_rev, mask], axis=-1)             # (T, B, X)
    act = act.reshape(T * B, X).astype(jnp.float32)

    kernel = functools.partial(_actor_kernel, B=B, T=T, E=E, H=H, A=A, off=off)
    vmem = pl.BlockSpec(memory_space=pltpu.MemorySpace.VMEM)
    return pl.pallas_call(
        kernel,
        out_shape=jax.ShapeDtypeStruct((B, A), jnp.float32),
        in_specs=[vmem, vmem],
        out_specs=vmem,
    )(act, slab)


def actor_reference(x_tokens, params):
    """Pure-JAX reference reproducing the PyTorch forward semantics."""
    B, T = x_tokens.shape
    H = params["w_hh_f"].shape[1]
    emb = jnp.take(params["embedding"], x_tokens, axis=0)     # (B, T, E)
    lengths = jnp.sum((x_tokens != PAD_ID).astype(jnp.int32), axis=1)

    def run_dir(order, w_ih, w_hh, b_ih, b_hh):
        h = jnp.zeros((B, H), jnp.float32)
        c = jnp.zeros((B, H), jnp.float32)
        for t in order:
            x_t = emb[:, t, :]
            gates = x_t @ w_ih.T + b_ih + h @ w_hh.T + b_hh
            i_g = jax.nn.sigmoid(gates[:, 0 * H:1 * H])
            f_g = jax.nn.sigmoid(gates[:, 1 * H:2 * H])
            g_g = jnp.tanh(gates[:, 2 * H:3 * H])
            o_g = jax.nn.sigmoid(gates[:, 3 * H:4 * H])
            c_new = f_g * c + i_g * g_g
            h_new = o_g * jnp.tanh(c_new)
            m = (t < lengths)[:, None]
            h = jnp.where(m, h_new, h)
            c = jnp.where(m, c_new, c)
        return h

    h_f = run_dir(range(T), params["w_ih_f"], params["w_hh_f"],
                  params["b_ih_f"], params["b_hh_f"])
    h_b = run_dir(range(T - 1, -1, -1), params["w_ih_b"], params["w_hh_b"],
                  params["b_ih_b"], params["b_hh_b"])
    hidden_cat = jnp.concatenate([h_f, h_b], axis=1)
    z = jnp.maximum(hidden_cat @ params["w1"].T + params["b1"], 0.0)
    logits = z @ params["w2"].T + params["b2"]
    return jax.nn.softmax(logits, axis=-1)


if __name__ == "__main__":
    key = jax.random.PRNGKey(0)
    pkey, xkey = jax.random.split(key)
    params = init_params(pkey, VOCAB_SIZE, EMBED_DIM, HIDDEN_DIM, ACTION_DIM)
    prepped = prepare_params(params)   # one-time packing, outside the jitted forward

    # Deterministic token ids with trailing padding (variable lengths).
    x = jax.random.randint(xkey, (BATCH, SEQ), 0, 1000, dtype=jnp.int32)
    x = x.at[0, 5:].set(PAD_ID)        # sequence 0 has length 5, sequence 1 length SEQ

    probs = actor_forward(x, prepped["embedding"], prepped["slab"])
    probs = jax.block_until_ready(probs)

    ref = actor_reference(x, params)
    assert probs.shape == (BATCH, ACTION_DIM)
    assert jnp.allclose(jnp.sum(probs, axis=-1), 1.0, atol=1e-5)
    assert jnp.allclose(probs, ref, atol=1e-4, rtol=1e-4), (probs, ref)

    print("KERNEL_OK")
</pallas_src>

<mosaic_0001>
module attributes {stable_mosaic.version = 11 : i64} {
  func.func @_actor_kernel(%arg0: memref<16x96xf32, #tpu.memory_space<vmem>>, %arg1: memref<280x256xf32, #tpu.memory_space<vmem>>, %arg2: memref<2x8xf32, #tpu.memory_space<vmem>>) attributes {dimension_semantics = [], scalar_prefetch = 0 : i64, scratch_operands = 0 : i64, tpu.core_type = #tpu.core_type<tc>} {
    %c0 = arith.constant 0 : index
    %c0_0 = arith.constant 0 : index
    %0 = vector.load %arg1[%c0, %c0_0] : memref<280x256xf32, #tpu.memory_space<vmem>>, vector<96x256xf32>
    %c96 = arith.constant 96 : index
    %c0_1 = arith.constant 0 : index
    %1 = vector.load %arg1[%c96, %c0_1] : memref<280x256xf32, #tpu.memory_space<vmem>>, vector<1x256xf32>
    %c104 = arith.constant 104 : index
    %c0_2 = arith.constant 0 : index
    %2 = vector.load %arg1[%c104, %c0_2] : memref<280x256xf32, #tpu.memory_space<vmem>>, vector<64x256xf32>
    %c0_3 = arith.constant 0 : index
    %c0_4 = arith.constant 0 : index
    %3 = vector.load %arg0[%c0_3, %c0_4] : memref<16x96xf32, #tpu.memory_space<vmem>>, vector<16x96xf32>
    %cst = arith.constant dense<0.000000e+00> : vector<16x256xf32>
    %4 = tpu.matmul %3, %0, %cst {dimension_numbers = #tpu.dot_dimension_numbers<[1], [0], [0], [1], [0, 0, 1, 1], [], []>} : vector<16x96xf32>, vector<96x256xf32>, vector<16x256xf32> -> vector<16x256xf32>
    %5 = vector.broadcast %1 : vector<1x256xf32> to vector<16x256xf32>
    %6 = arith.addf %4, %5 : vector<16x256xf32>
    %cst_5 = arith.constant 0.000000e+00 : f32
    %7 = vector.broadcast %cst_5 : f32 to vector<2x64xf32>
    %cst_6 = arith.constant 0.000000e+00 : f32
    %8 = vector.broadcast %cst_6 : f32 to vector<2x64xf32>
    %9 = vector.extract_strided_slice %6 {offsets = [0, 0], sizes = [2, 256], strides = [1, 1]} : vector<16x256xf32> to vector<2x256xf32>
    %cst_7 = arith.constant dense<0.000000e+00> : vector<2x256xf32>
    %10 = tpu.matmul %7, %2, %cst_7 {dimension_numbers = #tpu.dot_dimension_numbers<[1], [0], [0], [1], [0, 0, 1, 1], [], []>} : vector<2x64xf32>, vector<64x256xf32>, vector<2x256xf32> -> vector<2x256xf32>
    %11 = arith.addf %9, %10 : vector<2x256xf32>
    %12 = vector.extract_strided_slice %11 {offsets = [0, 0], sizes = [2, 128], strides = [1, 1]} : vector<2x256xf32> to vector<2x128xf32>
    %13 = arith.negf %12 : vector<2x128xf32>
    %14 = math.exp %13 : vector<2x128xf32>
    %cst_8 = arith.constant 1.000000e+00 : f32
    %15 = vector.broadcast %cst_8 : f32 to vector<2x128xf32>
    %16 = arith.addf %15, %14 : vector<2x128xf32>
    %17 = arith.divf %15, %16 : vector<2x128xf32>
    %18 = vector.extract_strided_slice %11 {offsets = [0, 128], sizes = [2, 64], strides = [1, 1]} : vector<2x256xf32> to vector<2x64xf32>
    %19 = math.tanh %18 : vector<2x64xf32>
    %20 = vector.extract_strided_slice %11 {offsets = [0, 192], sizes = [2, 64], strides = [1, 1]} : vector<2x256xf32> to vector<2x64xf32>
    %21 = arith.negf %20 : vector<2x64xf32>
    %22 = math.exp %21 : vector<2x64xf32>
    %cst_9 = arith.constant 1.000000e+00 : f32
    %23 = vector.broadcast %cst_9 : f32 to vector<2x64xf32>
    %24 = arith.addf %23, %22 : vector<2x64xf32>
    %25 = arith.divf %23, %24 : vector<2x64xf32>
    %26 = vector.extract_strided_slice %17 {offsets = [0, 64], sizes = [2, 64], strides = [1, 1]} : vector<2x128xf32> to vector<2x64xf32>
    %27 = arith.mulf %26, %8 : vector<2x64xf32>
    %28 = vector.extract_strided_slice %17 {offsets = [0, 0], sizes = [2, 64], strides = [1, 1]} : vector<2x128xf32> to vector<2x64xf32>
    %29 = arith.mulf %28, %19 : vector<2x64xf32>
    %30 = arith.addf %27, %29 : vector<2x64xf32>
    %31 = math.tanh %30 : vector<2x64xf32>
    %32 = arith.mulf %25, %31 : vector<2x64xf32>
    %c0_10 = arith.constant 0 : index
    %c32 = arith.constant 32 : index
    %33 = vector.load %arg0[%c0_10, %c32] : memref<16x96xf32, #tpu.memory_space<vmem>>, vector<2x64xf32>
    %34 = arith.subf %32, %7 : vector<2x64xf32>
    %35 = arith.mulf %33, %34 : vector<2x64xf32>
    %36 = arith.addf %7, %35 : vector<2x64xf32>
    %37 = arith.subf %30, %8 : vector<2x64xf32>
    %38 = arith.mulf %33, %37 : vector<2x64xf32>
    %39 = arith.addf %8, %38 : vector<2x64xf32>
    %40 = vector.extract_strided_slice %6 {offsets = [2, 0], sizes = [2, 256], strides = [1, 1]} : vector<16x256xf32> to vector<2x256xf32>
    %cst_11 = arith.constant dense<0.000000e+00> : vector<2x256xf32>
    %41 = tpu.matmul %36, %2, %cst_11 {dimension_numbers = #tpu.dot_dimension_numbers<[1], [0], [0], [1], [0, 0, 1, 1], [], []>} : vector<2x64xf32>, vector<64x256xf32>, vector<2x256xf32> -> vector<2x256xf32>
    %42 = arith.addf %40, %41 : vector<2x256xf32>
    %43 = vector.extract_strided_slice %42 {offsets = [0, 0], sizes = [2, 128], strides = [1, 1]} : vector<2x256xf32> to vector<2x128xf32>
    %44 = arith.negf %43 : vector<2x128xf32>
    %45 = math.exp %44 : vector<2x128xf32>
    %cst_12 = arith.constant 1.000000e+00 : f32
    %46 = vector.broadcast %cst_12 : f32 to vector<2x128xf32>
    %47 = arith.addf %46, %45 : vector<2x128xf32>
    %48 = arith.divf %46, %47 : vector<2x128xf32>
    %49 = vector.extract_strided_slice %42 {offsets = [0, 128], sizes = [2, 64], strides = [1, 1]} : vector<2x256xf32> to vector<2x64xf32>
    %50 = math.tanh %49 : vector<2x64xf32>
    %51 = vector.extract_strided_slice %42 {offsets = [0, 192], sizes = [2, 64], strides = [1, 1]} : vector<2x256xf32> to vector<2x64xf32>
    %52 = arith.negf %51 : vector<2x64xf32>
    %53 = math.exp %52 : vector<2x64xf32>
    %cst_13 = arith.constant 1.000000e+00 : f32
    %54 = vector.broadcast %cst_13 : f32 to vector<2x64xf32>
    %55 = arith.addf %54, %53 : vector<2x64xf32>
    %56 = arith.divf %54, %55 : vector<2x64xf32>
    %57 = vector.extract_strided_slice %48 {offsets = [0, 64], sizes = [2, 64], strides = [1, 1]} : vector<2x128xf32> to vector<2x64xf32>
    %58 = arith.mulf %57, %39 : vector<2x64xf32>
    %59 = vector.extract_strided_slice %48 {offsets = [0, 0], sizes = [2, 64], strides = [1, 1]} : vector<2x128xf32> to vector<2x64xf32>
    %60 = arith.mulf %59, %50 : vector<2x64xf32>
    %61 = arith.addf %58, %60 : vector<2x64xf32>
    %62 = math.tanh %61 : vector<2x64xf32>
    %63 = arith.mulf %56, %62 : vector<2x64xf32>
    %c2 = arith.constant 2 : index
    %c32_14 = arith.constant 32 : index
    %64 = vector.load %arg0[%c2, %c32_14] : memref<16x96xf32, #tpu.memory_space<vmem>>, vector<2x64xf32>
    %65 = arith.subf %63, %36 : vector<2x64xf32>
    %66 = arith.mulf %64, %65 : vector<2x64xf32>
    %67 = arith.addf %36, %66 : vector<2x64xf32>
    %68 = arith.subf %61, %39 : vector<2x64xf32>
    %69 = arith.mulf %64, %68 : vector<2x64xf32>
    %70 = arith.addf %39, %69 : vector<2x64xf32>
    %71 = vector.extract_strided_slice %6 {offsets = [4, 0], sizes = [2, 256], strides = [1, 1]} : vector<16x256xf32> to vector<2x256xf32>
    %cst_15 = arith.constant dense<0.000000e+00> : vector<2x256xf32>
    %72 = tpu.matmul %67, %2, %cst_15 {dimension_numbers = #tpu.dot_dimension_numbers<[1], [0], [0], [1], [0, 0, 1, 1], [], []>} : vector<2x64xf32>, vector<64x256xf32>, vector<2x256xf32> -> vector<2x256xf32>
    %73 = arith.addf %71, %72 : vector<2x256xf32>
    %74 = vector.extract_strided_slice %73 {offsets = [0, 0], sizes = [2, 128], strides = [1, 1]} : vector<2x256xf32> to vector<2x128xf32>
    %75 = arith.negf %74 : vector<2x128xf32>
    %76 = math.exp %75 : vector<2x128xf32>
    %cst_16 = arith.constant 1.000000e+00 : f32
    %77 = vector.broadcast %cst_16 : f32 to vector<2x128xf32>
    %78 = arith.addf %77, %76 : vector<2x128xf32>
    %79 = arith.divf %77, %78 : vector<2x128xf32>
    %80 = vector.extract_strided_slice %73 {offsets = [0, 128], sizes = [2, 64], strides = [1, 1]} : vector<2x256xf32> to vector<2x64xf32>
    %81 = math.tanh %80 : vector<2x64xf32>
    %82 = vector.extract_strided_slice %73 {offsets = [0, 192], sizes = [2, 64], strides = [1, 1]} : vector<2x256xf32> to vector<2x64xf32>
    %83 = arith.negf %82 : vector<2x64xf32>
    %84 = math.exp %83 : vector<2x64xf32>
    %cst_17 = arith.constant 1.000000e+00 : f32
    %85 = vector.broadcast %cst_17 : f32 to vector<2x64xf32>
    %86 = arith.addf %85, %84 : vector<2x64xf32>
    %87 = arith.divf %85, %86 : vector<2x64xf32>
    %88 = vector.extract_strided_slice %79 {offsets = [0, 64], sizes = [2, 64], strides = [1, 1]} : vector<2x128xf32> to vector<2x64xf32>
    %89 = arith.mulf %88, %70 : vector<2x64xf32>
    %90 = vector.extract_strided_slice %79 {offsets = [0, 0], sizes = [2, 64], strides = [1, 1]} : vector<2x128xf32> to vector<2x64xf32>
    %91 = arith.mulf %90, %81 : vector<2x64xf32>
    %92 = arith.addf %89, %91 : vector<2x64xf32>
    %93 = math.tanh %92 : vector<2x64xf32>
    %94 = arith.mulf %87, %93 : vector<2x64xf32>
    %c4 = arith.constant 4 : index
    %c32_18 = arith.constant 32 : index
    %95 = vector.load %arg0[%c4, %c32_18] : memref<16x96xf32, #tpu.memory_space<vmem>>, vector<2x64xf32>
    %96 = arith.subf %94, %67 : vector<2x64xf32>
    %97 = arith.mulf %95, %96 : vector<2x64xf32>
    %98 = arith.addf %67, %97 : vector<2x64xf32>
    %99 = arith.subf %92, %70 : vector<2x64xf32>
    %100 = arith.mulf %95, %99 : vector<2x64xf32>
    %101 = arith.addf %70, %100 : vector<2x64xf32>
    %102 = vector.extract_strided_slice %6 {offsets = [6, 0], sizes = [2, 256], strides = [1, 1]} : vector<16x256xf32> to vector<2x256xf32>
    %cst_19 = arith.constant dense<0.000000e+00> : vector<2x256xf32>
    %103 = tpu.matmul %98, %2, %cst_19 {dimension_numbers = #tpu.dot_dimension_numbers<[1], [0], [0], [1], [0, 0, 1, 1], [], []>} : vector<2x64xf32>, vector<64x256xf32>, vector<2x256xf32> -> vector<2x256xf32>
    %104 = arith.addf %102, %103 : vector<2x256xf32>
    %105 = vector.extract_strided_slice %104 {offsets = [0, 0], sizes = [2, 128], strides = [1, 1]} : vector<2x256xf32> to vector<2x128xf32>
    %106 = arith.negf %105 : vector<2x128xf32>
    %107 = math.exp %106 : vector<2x128xf32>
    %cst_20 = arith.constant 1.000000e+00 : f32
    %108 = vector.broadcast %cst_20 : f32 to vector<2x128xf32>
    %109 = arith.addf %108, %107 : vector<2x128xf32>
    %110 = arith.divf %108, %109 : vector<2x128xf32>
    %111 = vector.extract_strided_slice %104 {offsets = [0, 128], sizes = [2, 64], strides = [1, 1]} : vector<2x256xf32> to vector<2x64xf32>
    %112 = math.tanh %111 : vector<2x64xf32>
    %113 = vector.extract_strided_slice %104 {offsets = [0, 192], sizes = [2, 64], strides = [1, 1]} : vector<2x256xf32> to vector<2x64xf32>
    %114 = arith.negf %113 : vector<2x64xf32>
    %115 = math.exp %114 : vector<2x64xf32>
    %cst_21 = arith.constant 1.000000e+00 : f32
    %116 = vector.broadcast %cst_21 : f32 to vector<2x64xf32>
    %117 = arith.addf %116, %115 : vector<2x64xf32>
    %118 = arith.divf %116, %117 : vector<2x64xf32>
    %119 = vector.extract_strided_slice %110 {offsets = [0, 64], sizes = [2, 64], strides = [1, 1]} : vector<2x128xf32> to vector<2x64xf32>
    %120 = arith.mulf %119, %101 : vector<2x64xf32>
    %121 = vector.extract_strided_slice %110 {offsets = [0, 0], sizes = [2, 64], strides = [1, 1]} : vector<2x128xf32> to vector<2x64xf32>
    %122 = arith.mulf %121, %112 : vector<2x64xf32>
    %123 = arith.addf %120, %122 : vector<2x64xf32>
    %124 = math.tanh %123 : vector<2x64xf32>
    %125 = arith.mulf %118, %124 : vector<2x64xf32>
    %c6 = arith.constant 6 : index
    %c32_22 = arith.constant 32 : index
    %126 = vector.load %arg0[%c6, %c32_22] : memref<16x96xf32, #tpu.memory_space<vmem>>, vector<2x64xf32>
    %127 = arith.subf %125, %98 : vector<2x64xf32>
    %128 = arith.mulf %126, %127 : vector<2x64xf32>
    %129 = arith.addf %98, %128 : vector<2x64xf32>
    %130 = arith.subf %123, %101 : vector<2x64xf32>
    %131 = arith.mulf %126, %130 : vector<2x64xf32>
    %132 = arith.addf %101, %131 : vector<2x64xf32>
    %133 = vector.extract_strided_slice %6 {offsets = [8, 0], sizes = [2, 256], strides = [1, 1]} : vector<16x256xf32> to vector<2x256xf32>
    %cst_23 = arith.constant dense<0.000000e+00> : vector<2x256xf32>
    %134 = tpu.matmul %129, %2, %cst_23 {dimension_numbers = #tpu.dot_dimension_numbers<[1], [0], [0], [1], [0, 0, 1, 1], [], []>} : vector<2x64xf32>, vector<64x256xf32>, vector<2x256xf32> -> vector<2x256xf32>
    %135 = arith.addf %133, %134 : vector<2x256xf32>
    %136 = vector.extract_strided_slice %135 {offsets = [0, 0], sizes = [2, 128], strides = [1, 1]} : vector<2x256xf32> to vector<2x128xf32>
    %137 = arith.negf %136 : vector<2x128xf32>
    %138 = math.exp %137 : vector<2x128xf32>
    %cst_24 = arith.constant 1.000000e+00 : f32
    %139 = vector.broadcast %cst_24 : f32 to vector<2x128xf32>
    %140 = arith.addf %139, %138 : vector<2x128xf32>
    %141 = arith.divf %139, %140 : vector<2x128xf32>
    %142 = vector.extract_strided_slice %135 {offsets = [0, 128], sizes = [2, 64], strides = [1, 1]} : vector<2x256xf32> to vector<2x64xf32>
    %143 = math.tanh %142 : vector<2x64xf32>
    %144 = vector.extract_strided_slice %135 {offsets = [0, 192], sizes = [2, 64], strides = [1, 1]} : vector<2x256xf32> to vector<2x64xf32>
    %145 = arith.negf %144 : vector<2x64xf32>
    %146 = math.exp %145 : vector<2x64xf32>
    %cst_25 = arith.constant 1.000000e+00 : f32
    %147 = vector.broadcast %cst_25 : f32 to vector<2x64xf32>
    %148 = arith.addf %147, %146 : vector<2x64xf32>
    %149 = arith.divf %147, %148 : vector<2x64xf32>
    %150 = vector.extract_strided_slice %141 {offsets = [0, 64], sizes = [2, 64], strides = [1, 1]} : vector<2x128xf32> to vector<2x64xf32>
    %151 = arith.mulf %150, %132 : vector<2x64xf32>
    %152 = vector.extract_strided_slice %141 {offsets = [0, 0], sizes = [2, 64], strides = [1, 1]} : vector<2x128xf32> to vector<2x64xf32>
    %153 = arith.mulf %152, %143 : vector<2x64xf32>
    %154 = arith.addf %151, %153 : vector<2x64xf32>
    %155 = math.tanh %154 : vector<2x64xf32>
    %156 = arith.mulf %149, %155 : vector<2x64xf32>
    %c8 = arith.constant 8 : index
    %c32_26 = arith.constant 32 : index
    %157 = vector.load %arg0[%c8, %c32_26] : memref<16x96xf32, #tpu.memory_space<vmem>>, vector<2x64xf32>
    %158 = arith.subf %156, %129 : vector<2x64xf32>
    %159 = arith.mulf %157, %158 : vector<2x64xf32>
    %160 = arith.addf %129, %159 : vector<2x64xf32>
    %161 = arith.subf %154, %132 : vector<2x64xf32>
    %162 = arith.mulf %157, %161 : vector<2x64xf32>
    %163 = arith.addf %132, %162 : vector<2x64xf32>
    %164 = vector.extract_strided_slice %6 {offsets = [10, 0], sizes = [2, 256], strides = [1, 1]} : vector<16x256xf32> to vector<2x256xf32>
    %cst_27 = arith.constant dense<0.000000e+00> : vector<2x256xf32>
    %165 = tpu.matmul %160, %2, %cst_27 {dimension_numbers = #tpu.dot_dimension_numbers<[1], [0], [0], [1], [0, 0, 1, 1], [], []>} : vector<2x64xf32>, vector<64x256xf32>, vector<2x256xf32> -> vector<2x256xf32>
    %166 = arith.addf %164, %165 : vector<2x256xf32>
    %167 = vector.extract_strided_slice %166 {offsets = [0, 0], sizes = [2, 128], strides = [1, 1]} : vector<2x256xf32> to vector<2x128xf32>
    %168 = arith.negf %167 : vector<2x128xf32>
    %169 = math.exp %168 : vector<2x128xf32>
    %cst_28 = arith.constant 1.000000e+00 : f32
    %170 = vector.broadcast %cst_28 : f32 to vector<2x128xf32>
    %171 = arith.addf %170, %169 : vector<2x128xf32>
    %172 = arith.divf %170, %171 : vector<2x128xf32>
    %173 = vector.extract_strided_slice %166 {offsets = [0, 128], sizes = [2, 64], strides = [1, 1]} : vector<2x256xf32> to vector<2x64xf32>
    %174 = math.tanh %173 : vector<2x64xf32>
    %175 = vector.extract_strided_slice %166 {offsets = [0, 192], sizes = [2, 64], strides = [1, 1]} : vector<2x256xf32> to vector<2x64xf32>
    %176 = arith.negf %175 : vector<2x64xf32>
    %177 = math.exp %176 : vector<2x64xf32>
    %cst_29 = arith.constant 1.000000e+00 : f32
    %178 = vector.broadcast %cst_29 : f32 to vector<2x64xf32>
    %179 = arith.addf %178, %177 : vector<2x64xf32>
    %180 = arith.divf %178, %179 : vector<2x64xf32>
    %181 = vector.extract_strided_slice %172 {offsets = [0, 64], sizes = [2, 64], strides = [1, 1]} : vector<2x128xf32> to vector<2x64xf32>
    %182 = arith.mulf %181, %163 : vector<2x64xf32>
    %183 = vector.extract_strided_slice %172 {offsets = [0, 0], sizes = [2, 64], strides = [1, 1]} : vector<2x128xf32> to vector<2x64xf32>
    %184 = arith.mulf %183, %174 : vector<2x64xf32>
    %185 = arith.addf %182, %184 : vector<2x64xf32>
    %186 = math.tanh %185 : vector<2x64xf32>
    %187 = arith.mulf %180, %186 : vector<2x64xf32>
    %c10 = arith.constant 10 : index
    %c32_30 = arith.constant 32 : index
    %188 = vector.load %arg0[%c10, %c32_30] : memref<16x96xf32, #tpu.memory_space<vmem>>, vector<2x64xf32>
    %189 = arith.subf %187, %160 : vector<2x64xf32>
    %190 = arith.mulf %188, %189 : vector<2x64xf32>
    %191 = arith.addf %160, %190 : vector<2x64xf32>
    %192 = arith.subf %185, %163 : vector<2x64xf32>
    %193 = arith.mulf %188, %192 : vector<2x64xf32>
    %194 = arith.addf %163, %193 : vector<2x64xf32>
    %195 = vector.extract_strided_slice %6 {offsets = [12, 0], sizes = [2, 256], strides = [1, 1]} : vector<16x256xf32> to vector<2x256xf32>
    %cst_31 = arith.constant dense<0.000000e+00> : vector<2x256xf32>
    %196 = tpu.matmul %191, %2, %cst_31 {dimension_numbers = #tpu.dot_dimension_numbers<[1], [0], [0], [1], [0, 0, 1, 1], [], []>} : vector<2x64xf32>, vector<64x256xf32>, vector<2x256xf32> -> vector<2x256xf32>
    %197 = arith.addf %195, %196 : vector<2x256xf32>
    %198 = vector.extract_strided_slice %197 {offsets = [0, 0], sizes = [2, 128], strides = [1, 1]} : vector<2x256xf32> to vector<2x128xf32>
    %199 = arith.negf %198 : vector<2x128xf32>
    %200 = math.exp %199 : vector<2x128xf32>
    %cst_32 = arith.constant 1.000000e+00 : f32
    %201 = vector.broadcast %cst_32 : f32 to vector<2x128xf32>
    %202 = arith.addf %201, %200 : vector<2x128xf32>
    %203 = arith.divf %201, %202 : vector<2x128xf32>
    %204 = vector.extract_strided_slice %197 {offsets = [0, 128], sizes = [2, 64], strides = [1, 1]} : vector<2x256xf32> to vector<2x64xf32>
    %205 = math.tanh %204 : vector<2x64xf32>
    %206 = vector.extract_strided_slice %197 {offsets = [0, 192], sizes = [2, 64], strides = [1, 1]} : vector<2x256xf32> to vector<2x64xf32>
    %207 = arith.negf %206 : vector<2x64xf32>
    %208 = math.exp %207 : vector<2x64xf32>
    %cst_33 = arith.constant 1.000000e+00 : f32
    %209 = vector.broadcast %cst_33 : f32 to vector<2x64xf32>
    %210 = arith.addf %209, %208 : vector<2x64xf32>
    %211 = arith.divf %209, %210 : vector<2x64xf32>
    %212 = vector.extract_strided_slice %203 {offsets = [0, 64], sizes = [2, 64], strides = [1, 1]} : vector<2x128xf32> to vector<2x64xf32>
    %213 = arith.mulf %212, %194 : vector<2x64xf32>
    %214 = vector.extract_strided_slice %203 {offsets = [0, 0], sizes = [2, 64], strides = [1, 1]} : vector<2x128xf32> to vector<2x64xf32>
    %215 = arith.mulf %214, %205 : vector<2x64xf32>
    %216 = arith.addf %213, %215 : vector<2x64xf32>
    %217 = math.tanh %216 : vector<2x64xf32>
    %218 = arith.mulf %211, %217 : vector<2x64xf32>
    %c12 = arith.constant 12 : index
    %c32_34 = arith.constant 32 : index
    %219 = vector.load %arg0[%c12, %c32_34] : memref<16x96xf32, #tpu.memory_space<vmem>>, vector<2x64xf32>
    %220 = arith.subf %218, %191 : vector<2x64xf32>
    %221 = arith.mulf %219, %220 : vector<2x64xf32>
    %222 = arith.addf %191, %221 : vector<2x64xf32>
    %223 = arith.subf %216, %194 : vector<2x64xf32>
    %224 = arith.mulf %219, %223 : vector<2x64xf32>
    %225 = arith.addf %194, %224 : vector<2x64xf32>
    %226 = vector.extract_strided_slice %6 {offsets = [14, 0], sizes = [2, 256], strides = [1, 1]} : vector<16x256xf32> to vector<2x256xf32>
    %cst_35 = arith.constant dense<0.000000e+00> : vector<2x256xf32>
    %227 = tpu.matmul %222, %2, %cst_35 {dimension_numbers = #tpu.dot_dimension_numbers<[1], [0], [0], [1], [0, 0, 1, 1], [], []>} : vector<2x64xf32>, vector<64x256xf32>, vector<2x256xf32> -> vector<2x256xf32>
    %228 = arith.addf %226, %227 : vector<2x256xf32>
    %229 = vector.extract_strided_slice %228 {offsets = [0, 0], sizes = [2, 128], strides = [1, 1]} : vector<2x256xf32> to vector<2x128xf32>
    %230 = arith.negf %229 : vector<2x128xf32>
    %231 = math.exp %230 : vector<2x128xf32>
    %cst_36 = arith.constant 1.000000e+00 : f32
    %232 = vector.broadcast %cst_36 : f32 to vector<2x128xf32>
    %233 = arith.addf %232, %231 : vector<2x128xf32>
    %234 = arith.divf %232, %233 : vector<2x128xf32>
    %235 = vector.extract_strided_slice %228 {offsets = [0, 128], sizes = [2, 64], strides = [1, 1]} : vector<2x256xf32> to vector<2x64xf32>
    %236 = math.tanh %235 : vector<2x64xf32>
    %237 = vector.extract_strided_slice %228 {offsets = [0, 192], sizes = [2, 64], strides = [1, 1]} : vector<2x256xf32> to vector<2x64xf32>
    %238 = arith.negf %237 : vector<2x64xf32>
    %239 = math.exp %238 : vector<2x64xf32>
    %cst_37 = arith.constant 1.000000e+00 : f32
    %240 = vector.broadcast %cst_37 : f32 to vector<2x64xf32>
    %241 = arith.addf %240, %239 : vector<2x64xf32>
    %242 = arith.divf %240, %241 : vector<2x64xf32>
    %243 = vector.extract_strided_slice %234 {offsets = [0, 64], sizes = [2, 64], strides = [1, 1]} : vector<2x128xf32> to vector<2x64xf32>
    %244 = arith.mulf %243, %225 : vector<2x64xf32>
    %245 = vector.extract_strided_slice %234 {offsets = [0, 0], sizes = [2, 64], strides = [1, 1]} : vector<2x128xf32> to vector<2x64xf32>
    %246 = arith.mulf %245, %236 : vector<2x64xf32>
    %247 = arith.addf %244, %246 : vector<2x64xf32>
    %248 = math.tanh %247 : vector<2x64xf32>
    %249 = arith.mulf %242, %248 : vector<2x64xf32>
    %c14 = arith.constant 14 : index
    %c32_38 = arith.constant 32 : index
    %250 = vector.load %arg0[%c14, %c32_38] : memref<16x96xf32, #tpu.memory_space<vmem>>, vector<2x64xf32>
    %251 = arith.subf %249, %222 : vector<2x64xf32>
    %252 = arith.mulf %250, %251 : vector<2x64xf32>
    %253 = arith.addf %222, %252 : vector<2x64xf32>
    %c168 = arith.constant 168 : index
    %c0_39 = arith.constant 0 : index
    %254 = vector.load %arg1[%c168, %c0_39] : memref<280x256xf32, #tpu.memory_space<vmem>>, vector<64x32xf32>
    %c232 = arith.constant 232 : index
    %c0_40 = arith.constant 0 : index
    %255 = vector.load %arg1[%c232, %c0_40] : memref<280x256xf32, #tpu.memory_space<vmem>>, vector<1x32xf32>
    %c240 = arith.constant 240 : index
    %c0_41 = arith.constant 0 : index
    %256 = vector.load %arg1[%c240, %c0_41] : memref<280x256xf32, #tpu.memory_space<vmem>>, vector<32x8xf32>
    %c272 = arith.constant 272 : index
    %c0_42 = arith.constant 0 : index
    %257 = vector.load %arg1[%c272, %c0_42] : memref<280x256xf32, #tpu.memory_space<vmem>>, vector<1x8xf32>
    %cst_43 = arith.constant dense<0.000000e+00> : vector<2x32xf32>
    %258 = tpu.matmul %253, %254, %cst_43 {dimension_numbers = #tpu.dot_dimension_numbers<[1], [0], [0], [1], [0, 0, 1, 1], [], []>} : vector<2x64xf32>, vector<64x32xf32>, vector<2x32xf32> -> vector<2x32xf32>
    %259 = vector.broadcast %255 : vector<1x32xf32> to vector<2x32xf32>
    %260 = arith.addf %258, %259 : vector<2x32xf32>
    %cst_44 = arith.constant 0.000000e+00 : f32
    %261 = vector.broadcast %cst_44 : f32 to vector<2x32xf32>
    %262 = arith.maximumf %260, %261 : vector<2x32xf32>
    %cst_45 = arith.constant dense<0.000000e+00> : vector<2x8xf32>
    %263 = tpu.matmul %262, %256, %cst_45 {dimension_numbers = #tpu.dot_dimension_numbers<[1], [0], [0], [1], [0, 0, 1, 1], [], []>} : vector<2x32xf32>, vector<32x8xf32>, vector<2x8xf32> -> vector<2x8xf32>
    %264 = vector.broadcast %257 : vector<1x8xf32> to vector<2x8xf32>
    %265 = arith.addf %263, %264 : vector<2x8xf32>
    %cst_46 = arith.constant dense<0xFF800000> : vector<2xf32>
    %266 = vector.multi_reduction <maximumf>, %265, %cst_46 [1] : vector<2x8xf32> to vector<2xf32>
    %267 = vector.shape_cast %266 : vector<2xf32> to vector<2x1xf32>
    %268 = vector.broadcast %267 : vector<2x1xf32> to vector<2x8xf32>
    %269 = arith.subf %265, %268 : vector<2x8xf32>
    %270 = math.exp %269 : vector<2x8xf32>
    %cst_47 = arith.constant dense<0.000000e+00> : vector<2xf32>
    %271 = vector.multi_reduction <add>, %270, %cst_47 [1] : vector<2x8xf32> to vector<2xf32>
    %272 = vector.shape_cast %271 : vector<2xf32> to vector<2x1xf32>
    %273 = tpu.reciprocal %272 : vector<2x1xf32> -> vector<2x1xf32>
    %274 = vector.broadcast %273 : vector<2x1xf32> to vector<2x8xf32>
    %275 = arith.mulf %270, %274 : vector<2x8xf32>
    %c0_48 = arith.constant 0 : index
    %c0_49 = arith.constant 0 : index
    %276 = vector.load %arg2[%c0_48, %c0_49] : memref<2x8xf32, #tpu.memory_space<vmem>>, vector<2x8xf32>
    tpu.vector_store %arg2[%c0_48, %c0_49], %275 {strides = array<i32>} : memref<2x8xf32, #tpu.memory_space<vmem>>, vector<2x8xf32>,
    return
  }
}

</mosaic_0001>

<llo_original>
// kernel: actor_forward.1
$region0: #{actor_forward.1}
  #allocation0 [shape = 'u32[]', space=smem, size = 0x4, offset = 0x4, fixed_abs, tag = 'smem constant byte address 0x4 - core index']
  #allocation1 [shape = 'u32[144,128]{1,0:T(1,128)}', space=vmem, size = 0x12000, scoped, tag = 'internal scratch']
  %s0 = inlined_call_operand.vmem [shape: f32[16,96], index: 0, kind: input, shape index: {}]
  %s1 = inlined_call_operand.vmem [shape: f32[280,256], index: 1, kind: input, shape index: {}]
  %s2 = inlined_call_operand.hbm [shape: f32[2,8], index: 2, kind: output, shape index: {}]
  %s3 = sld [smem:[#allocation0]]
  $region18: #{actor_forward.1} parent=0
    _
  %s5 = ssub.s32 1, %s3
  %s6 = scalar_select 0, %s5, %s3
  $region1: #{actor_forward.1} parent=0
    #allocation2 [shape = 'u8[1024]{0}', space=vmem, size = 0x400, scoped, tag = 'output window, operand 0, single buffered']
    #allocation3 [shape = 's32[1]{0}', space=sflag, size = 0x4, scoped, tag = 'scoped memory for actor_forward.1']
    %7 = vsyncpa [#allocation3], 0
    // Predicated region
    $region2: #{actor_forward.1} parent=1 // pred_check
      _
    $region3: #{actor_forward.1} parent=1 // pred_check_branch
      %9 = sbr.rel (0) target = $region5
    $region4: #{actor_forward.1} parent=1 // pred_region
      _
    $region5: #{actor_forward.1} parent=1 // pred_fallthru
      _
    // Predicated region
    $region6: #{actor_forward.1} parent=1 // pred_check
      _
    $region7: #{actor_forward.1} parent=1 // pred_check_branch
      %11 = sbr.rel (0) target = $region9
    $region8: #{actor_forward.1} parent=1 // pred_region
      _
    $region9: #{actor_forward.1} parent=1 // pred_fallthru
      _
    %v12 = vld [vmem:[%s1] sm:$0xff]
    %v13 = vld [vmem:[%s1 + $0x8] sm:$0xff]
    %v14 = vld [vmem:[%s1 + $0x10] sm:$0xff]
    %v15 = vld [vmem:[%s1 + $0x18] sm:$0xff]
    %v16 = vld [vmem:[%s1 + $0x20] sm:$0xff]
    %v17 = vld [vmem:[%s1 + $0x28] sm:$0xff]
    %v18 = vld [vmem:[%s1 + $0x30] sm:$0xff]
    %v19 = vld [vmem:[%s1 + $0x38] sm:$0xff]
    %v20 = vld [vmem:[%s1 + $0x40] sm:$0xff]
    %v21 = vld [vmem:[%s1 + $0x48] sm:$0xff]
    %v22 = vld [vmem:[%s1 + $0x50] sm:$0xff]
    %v23 = vld [vmem:[%s1 + $0x58] sm:$0xff]
    %v24 = vld [vmem:[%s1 + $0x60] sm:$0xff]
    %v25 = vld [vmem:[%s1 + $0x68] sm:$0xff]
    %v26 = vld [vmem:[%s1 + $0x70] sm:$0xff]
    %v27 = vld [vmem:[%s1 + $0x78] sm:$0xff]
    %v28 = vld [vmem:[%s1 + $0x80] sm:$0xff]
    %v29 = vld [vmem:[%s1 + $0x88] sm:$0xff]
    %v30 = vld [vmem:[%s1 + $0x90] sm:$0xff]
    %v31 = vld [vmem:[%s1 + $0x98] sm:$0xff]
    %v32 = vld [vmem:[%s1 + $0xa0] sm:$0xff]
    %v33 = vld [vmem:[%s1 + $0xa8] sm:$0xff]
    %v34 = vld [vmem:[%s1 + $0xb0] sm:$0xff]
    %v35 = vld [vmem:[%s1 + $0xb8] sm:$0xff]
    %s36 = scalar_lea.vmem %s1, 192
    %v37 = vld [vmem:[%s36] ss:$8 sm:$0x3]
    %v38 = vld [vmem:[%s1 + $0xd0] sm:$0xff]
    %v39 = vld [vmem:[%s1 + $0xd8] sm:$0xff]
    %v40 = vld [vmem:[%s1 + $0xe0] sm:$0xff]
    %v41 = vld [vmem:[%s1 + $0xe8] sm:$0xff]
    %v42 = vld [vmem:[%s1 + $0xf0] sm:$0xff]
    %v43 = vld [vmem:[%s1 + $0xf8] sm:$0xff]
    %v44 = vld [vmem:[%s1 + $0x100] sm:$0xff]
    %v45 = vld [vmem:[%s1 + $0x108] sm:$0xff]
    %v46 = vld [vmem:[%s1 + $0x110] sm:$0xff]
    %v47 = vld [vmem:[%s1 + $0x118] sm:$0xff]
    %v48 = vld [vmem:[%s1 + $0x120] sm:$0xff]
    %v49 = vld [vmem:[%s1 + $0x128] sm:$0xff]
    %v50 = vld [vmem:[%s1 + $0x130] sm:$0xff]
    %v51 = vld [vmem:[%s1 + $0x138] sm:$0xff]
    %v52 = vld [vmem:[%s1 + $0x140] sm:$0xff]
    %v53 = vld [vmem:[%s1 + $0x148] sm:$0xff]
    %v54 = vld [vmem:[%s0] sm:$0xff]
    %v55 = vld [vmem:[%s0 + $0x8] sm:$0xff]
    %v57 = vlaneseq
    %v58 = vshrl.u32 %v57, 7
    %v59 = vsub.s32 0, %v58
    %v60 = vrot.slane %v37, %v59
    %v61 = vlaneseq
    %v62 = vshrl.u32 %v61, 7
    %v63 = vsub.s32 1, %v62
    %v64 = vrot.slane %v37, %v63
    %vm67 = vcmask 785408
    %v69 = vsel %vm67, %v54, 0
    %v72 = vsel %vm67, %v55, 0
    %74 = vmatprep.subr.mxu0 %v13
    %75 = vmatpush1.msra.mxu0 %v12
    %76 = vmatprep.subr.mxu0 %v15
    %77 = vmatpush1.msra.mxu0 %v14
    %78 = vmatprep.subr.mxu0 %v17
    %79 = vmatpush1.msra.mxu0 %v16
    %80 = vmatprep.subr.mxu0 %v19
    %81 = vmatpush1.msra.mxu0 %v18
    %82 = vmatprep.subr.mxu0 %v21
    %83 = vmatpush1.msra.mxu0 %v20
    %84 = vmatprep.subr.mxu0 %v23
    %85 = vmatpush1.msra.mxu0 %v22
    %86 = vmatprep.subr.mxu0 %v25
    %87 = vmatpush1.msra.mxu0 %v24
    %88 = vmatprep.subr.mxu0 %v27
    %89 = vmatpush1.msra.mxu0 %v26
    %90 = vmatprep.subr.mxu0 %v29
    %91 = vmatpush1.msra.mxu0 %v28
    %92 = vmatprep.subr.mxu0 %v31
    %93 = vmatpush1.msra.mxu0 %v30
    %94 = vmatprep.subr.mxu0 %v33
    %95 = vmatpush1.msra.mxu0 %v32
    %96 = vmatprep.subr.mxu0 %v35
    %97 = vmatpush1.msra.mxu0 %v34
    %98 = vmatprep.subr.mxu0 0.0
    %99 = vmatpush1.msra.mxu0 0.0
    %100 = vmatprep.subr.mxu0 0.0
    %101 = vmatpush1.msra.mxu0 0.0
    %102 = vmatprep.subr.mxu0 0.0
    %103 = vmatpush1.msra.mxu0 0.0
    %104 = vmatprep.subr.mxu0 0.0
    %105 = vmatpush1.msra.mxu0 0.0
    %106 = vmatprep.subr.mxu0 0.0
    %107 = vmatpush1.msra.mxu0 0.0
    %108 = vmatprep.subr.mxu0 0.0
    %109 = vmatpush1.msra.mxu0 0.0
    %110 = vmatprep.subr.mxu0 0.0
    %111 = vmatpush1.msra.mxu0 0.0
    %112 = vmatprep.subr.mxu0 0.0
    %113 = vmatpush1.msra.mxu0 0.0
    %114 = vmatprep.subr.mxu0 0.0
    %115 = vmatpush1.msra.mxu0 0.0
    %116 = vmatprep.subr.mxu0 0.0
    %117 = vmatpush1.msra.mxu0 0.0
    %118 = vmatprep.subr.mxu0 0.0
    %119 = vmatpush1.msra.mxu0 0.0
    %120 = vmatprep.subr.mxu0 0.0
    %121 = vmatpush1.msra.mxu0 0.0
    %122 = vmatprep.subr.mxu0 0.0
    %123 = vmatpush1.msra.mxu0 0.0
    %124 = vmatprep.subr.mxu0 0.0
    %125 = vmatpush1.msra.mxu0 0.0
    %126 = vmatprep.subr.mxu0 0.0
    %127 = vmatpush1.msra.mxu0 0.0
    %128 = vmatprep.subr.mxu0 0.0
    %129 = vmatpush1.msra.mxu0 0.0
    %130 = vmatprep.subr.mxu0 0.0
    %131 = vmatpush1.msra.mxu0 0.0
    %132 = vmatprep.subr.mxu0 0.0
    %133 = vmatpush1.msra.mxu0 0.0
    %134 = vmatprep.subr.mxu0 0.0
    %135 = vmatpush1.msra.mxu0 0.0
    %136 = vmatprep.subr.mxu0 0.0
    %137 = vmatpush1.msra.mxu0 0.0
    %138 = vmatprep.mubr.f32.mxu0 0.0
    %139 = vmatmul.mubr.f32.gmra.mrb[0].mxu0 %v69
    %v140 = vpop.f32.mrb[0].mxu0
    %v141 = vadd.f32 %v60, %v140
    %v142 = vpop.f32.mrb[0].mxu0
    %v143 = vadd.f32 %v64, %v142
    %144 = vmatprep.mubr.f32.mxu0 0.0
    %145 = vmatmul.mubr.f32.gmra.mrb[0].mxu0 %v72
    %v146 = vpop.f32.mrb[0].mxu0
    %v147 = vadd.f32 %v60, %v146
    %v148 = vpop.f32.mrb[0].mxu0
    %v149 = vadd.f32 %v64, %v148
    %150 = vdwg.mxu0
    %vm151 = vcmask 523264
    %v153 = vsel %vm151, 0.0, 0
    %155 = vmatprep.subr.mxu0 %v39
    %156 = vmatpush1.msra.mxu0 %v38
    %157 = vmatprep.subr.mxu0 %v41
    %158 = vmatpush1.msra.mxu0 %v40
    %159 = vmatprep.subr.mxu0 %v43
    %160 = vmatpush1.msra.mxu0 %v42
    %161 = vmatprep.subr.mxu0 %v45
    %162 = vmatpush1.msra.mxu0 %v44
    %163 = vmatprep.subr.mxu0 %v47
    %164 = vmatpush1.msra.mxu0 %v46
    %165 = vmatprep.subr.mxu0 %v49
    %166 = vmatpush1.msra.mxu0 %v48
    %167 = vmatprep.subr.mxu0 %v51
    %168 = vmatpush1.msra.mxu0 %v50
    %169 = vmatprep.subr.mxu0 %v53
    %170 = vmatpush1.msra.mxu0 %v52
    %171 = vmatprep.subr.mxu0 0.0
    %172 = vmatpush1.msra.mxu0 0.0
    %173 = vmatprep.subr.mxu0 0.0
    %174 = vmatpush1.msra.mxu0 0.0
    %175 = vmatprep.subr.mxu0 0.0
    %176 = vmatpush1.msra.mxu0 0.0
    %177 = vmatprep.subr.mxu0 0.0
    %178 = vmatpush1.msra.mxu0 0.0
    %179 = vmatprep.subr.mxu0 0.0
    %180 = vmatpush1.msra.mxu0 0.0
    %181 = vmatprep.subr.mxu0 0.0
    %182 = vmatpush1.msra.mxu0 0.0
    %183 = vmatprep.subr.mxu0 0.0
    %184 = vmatpush1.msra.mxu0 0.0
    %185 = vmatprep.subr.mxu0 0.0
    %186 = vmatpush1.msra.mxu0 0.0
    %187 = vmatprep.subr.mxu0 0.0
    %188 = vmatpush1.msra.mxu0 0.0
    %189 = vmatprep.subr.mxu0 0.0
    %190 = vmatpush1.msra.mxu0 0.0
    %191 = vmatprep.subr.mxu0 0.0
    %192 = vmatpush1.msra.mxu0 0.0
    %193 = vmatprep.subr.mxu0 0.0
    %194 = vmatpush1.msra.mxu0 0.0
    %195 = vmatprep.subr.mxu0 0.0
    %196 = vmatpush1.msra.mxu0 0.0
    %197 = vmatprep.subr.mxu0 0.0
    %198 = vmatpush1.msra.mxu0 0.0
    %199 = vmatprep.subr.mxu0 0.0
    %200 = vmatpush1.msra.mxu0 0.0
    %201 = vmatprep.subr.mxu0 0.0
    %202 = vmatpush1.msra.mxu0 0.0
    %203 = vmatprep.subr.mxu0 0.0
    %204 = vmatpush1.msra.mxu0 0.0
    %205 = vmatprep.subr.mxu0 0.0
    %206 = vmatpush1.msra.mxu0 0.0
    %207 = vmatprep.subr.mxu0 0.0
    %208 = vmatpush1.msra.mxu0 0.0
    %209 = vmatprep.subr.mxu0 0.0
    %210 = vmatpush1.msra.mxu0 0.0
    %211 = vmatprep.subr.mxu0 0.0
    %212 = vmatpush1.msra.mxu0 0.0
    %213 = vmatprep.subr.mxu0 0.0
    %214 = vmatpush1.msra.mxu0 0.0
    %215 = vmatprep.subr.mxu0 0.0
    %216 = vmatpush1.msra.mxu0 0.0
    %217 = vmatprep.subr.mxu0 0.0
    %218 = vmatpush1.msra.mxu0 0.0
    %219 = vmatprep.mubr.f32.mxu0 0.0
    %220 = vmatmul.mubr.f32.gmra.mrb[0].mxu0 %v153
    %v221 = vpop.f32.mrb[0].mxu0
    %v222 = vadd.f32 0.0, %v221
    %v223 = vpop.f32.mrb[0].mxu0
    %v224 = vadd.f32 0.0, %v223
    %225 = vdwg.mxu0
    %v226 = vadd.f32 %v141, %v222
    %v227 = vadd.f32 %v143, %v224
    %v228 = vxor.u32 %v226, 2147483648
    %v229 = vmul.f32 %v228, 1.442695
    %v230 = vpow.pop %v229
    %v231 = vadd.f32 %v230, 1.0
    %v232 = vrcp.pop %v231
    %v233 = vmul.f32 1.0, %v232
    %v234 = vtanh.pop %v227
    %v235 = vxor.u32 %v227, 2147483648
    %v236 = vmul.f32 %v235, 1.442695
    %v237 = vpow.pop %v236
    %v238 = vadd.f32 %v237, 1.0
    %v239 = vrcp.pop %v238
    %v240 = vmul.f32 1.0, %v239
    %v241 = vmul.f32 %v233, 0.0
    %v242 = vmul.f32 %v233, %v234
    %244 = vrot.lane.b32.xlu0 %v242, 64
    %v245 = vpop.permute.xlu0 %244
    %v247 = vadd.f32 %v241, %v245
    %v248 = vtanh.pop %v247
    %v249 = vmul.f32 %v240, %v248
    %v250 = vld [vmem:[%s0] sm:$0x3]
    %252 = vrot.lane.b32.xlu0 %v249, 96
    %v253 = vpop.permute.xlu0 %252
    %v255 = vmul.f32 %v250, %v253
    %v256 = vadd.f32 %v255, 0.0
    %258 = vrot.lane.b32.xlu0 %v247, 96
    %v259 = vpop.permute.xlu0 %258
    %v261 = vmul.f32 %v250, %v259
    %v262 = vadd.f32 %v261, 0.0
    %264 = vrot.lane.b32.xlu0 %v256, 96
    %v265 = vpop.permute.xlu0 %264
    %v266 = vsel %vm151, %v265, 0
    %268 = vmatprep.subr.mxu0 %v39
    %269 = vmatpush1.msra.mxu0 %v38
    %270 = vmatprep.subr.mxu0 %v41
    %271 = vmatpush1.msra.mxu0 %v40
    %272 = vmatprep.subr.mxu0 %v43
    %273 = vmatpush1.msra.mxu0 %v42
    %274 = vmatprep.subr.mxu0 %v45
    %275 = vmatpush1.msra.mxu0 %v44
    %276 = vmatprep.subr.mxu0 %v47
    %277 = vmatpush1.msra.mxu0 %v46
    %278 = vmatprep.subr.mxu0 %v49
    %279 = vmatpush1.msra.mxu0 %v48
    %280 = vmatprep.subr.mxu0 %v51
    %281 = vmatpush1.msra.mxu0 %v50
    %282 = vmatprep.subr.mxu0 %v53
    %283 = vmatpush1.msra.mxu0 %v52
    %284 = vmatprep.subr.mxu0 0.0
    %285 = vmatpush1.msra.mxu0 0.0
    %286 = vmatprep.subr.mxu0 0.0
    %287 = vmatpush1.msra.mxu0 0.0
    %288 = vmatprep.subr.mxu0 0.0
    %289 = vmatpush1.msra.mxu0 0.0
    %290 = vmatprep.subr.mxu0 0.0
    %291 = vmatpush1.msra.mxu0 0.0
    %292 = vmatprep.subr.mxu0 0.0
    %293 = vmatpush1.msra.mxu0 0.0
    %294 = vmatprep.subr.mxu0 0.0
    %295 = vmatpush1.msra.mxu0 0.0
    %296 = vmatprep.subr.mxu0 0.0
    %297 = vmatpush1.msra.mxu0 0.0
    %298 = vmatprep.subr.mxu0 0.0
    %299 = vmatpush1.msra.mxu0 0.0
    %300 = vmatprep.subr.mxu0 0.0
    %301 = vmatpush1.msra.mxu0 0.0
    %302 = vmatprep.subr.mxu0 0.0
    %303 = vmatpush1.msra.mxu0 0.0
    %304 = vmatprep.subr.mxu0 0.0
    %305 = vmatpush1.msra.mxu0 0.0
    %306 = vmatprep.subr.mxu0 0.0
    %307 = vmatpush1.msra.mxu0 0.0
    %308 = vmatprep.subr.mxu0 0.0
    %309 = vmatpush1.msra.mxu0 0.0
    %310 = vmatprep.subr.mxu0 0.0
    %311 = vmatpush1.msra.mxu0 0.0
    %312 = vmatprep.subr.mxu0 0.0
    %313 = vmatpush1.msra.mxu0 0.0
    %314 = vmatprep.subr.mxu0 0.0
    %315 = vmatpush1.msra.mxu0 0.0
    %316 = vmatprep.subr.mxu0 0.0
    %317 = vmatpush1.msra.mxu0 0.0
    %318 = vmatprep.subr.mxu0 0.0
    %319 = vmatpush1.msra.mxu0 0.0
    %320 = vmatprep.subr.mxu0 0.0
    %321 = vmatpush1.msra.mxu0 0.0
    %322 = vmatprep.subr.mxu0 0.0
    %323 = vmatpush1.msra.mxu0 0.0
    %324 = vmatprep.subr.mxu0 0.0
    %325 = vmatpush1.msra.mxu0 0.0
    %326 = vmatprep.subr.mxu0 0.0
    %327 = vmatpush1.msra.mxu0 0.0
    %328 = vmatprep.subr.mxu0 0.0
    %329 = vmatpush1.msra.mxu0 0.0
    %330 = vmatprep.subr.mxu0 0.0
    %331 = vmatpush1.msra.mxu0 0.0
    %332 = vmatprep.mubr.f32.mxu0 0.0
    %333 = vmatmul.mubr.f32.gmra.mrb[0].mxu0 %v266
    %v334 = vpop.f32.mrb[0].mxu0
    %v335 = vadd.f32 0.0, %v334
    %v336 = vpop.f32.mrb[0].mxu0
    %v337 = vadd.f32 0.0, %v336
    %338 = vdwg.mxu0
    %v341 = vrot.slane %v335, 6
    %v342 = vrot.slane %v337, 6
    %v345 = vadd.f32 %v141, %v341
    %v346 = vadd.f32 %v143, %v342
    %v347 = vxor.u32 %v345, 2147483648
    %v348 = vmul.f32 %v347, 1.442695
    %v349 = vpow.pop %v348
    %v350 = vadd.f32 %v349, 1.0
    %v351 = vrcp.pop %v350
    %v352 = vmul.f32 1.0, %v351
    %v353 = vtanh.pop %v346
    %v354 = vxor.u32 %v346, 2147483648
    %v355 = vmul.f32 %v354, 1.442695
    %v356 = vpow.pop %v355
    %v357 = vadd.f32 %v356, 1.0
    %v358 = vrcp.pop %v357
    %v359 = vmul.f32 1.0, %v358
    %v361 = vrot.slane %v262, 6
    %362 = vrot.lane.b32.xlu0 %v361, 32
    %v363 = vpop.permute.xlu0 %362
    %v365 = vmul.f32 %v352, %v363
    %v366 = vmul.f32 %v352, %v353
    %368 = vrot.lane.b32.xlu0 %v366, 64
    %v369 = vpop.permute.xlu0 %368
    %v371 = vadd.f32 %v365, %v369
    %v372 = vtanh.pop %v371
    %v373 = vmul.f32 %v359, %v372
    %v374 = vld [vmem:[%s0 + $0x2] sm:$0x3]
    %v375 = vrot.slane %v256, 6
    %376 = vrot.lane.b32.xlu0 %v375, 32
    %v377 = vpop.permute.xlu0 %376
    %v379 = vsub.f32 %v373, %v377
    %v381 = vrot.slane %v379, 2
    %382 = vrot.lane.b32.xlu0 %v381, 96
    %v383 = vpop.permute.xlu0 %382
    %v385 = vmul.f32 %v374, %v383
    %v386 = vadd.f32 %v256, %v385
    %v387 = vsub.f32 %v371, %v363
    %v389 = vrot.slane %v387, 2
    %390 = vrot.lane.b32.xlu0 %v389, 96
    %v391 = vpop.permute.xlu0 %390
    %v393 = vmul.f32 %v374, %v391
    %v394 = vadd.f32 %v262, %v393
    %396 = vrot.lane.b32.xlu0 %v386, 96
    %v397 = vpop.permute.xlu0 %396
    %v398 = vsel %vm151, %v397, 0
    %400 = vmatprep.subr.mxu0 %v39
    %401 = vmatpush1.msra.mxu0 %v38
    %402 = vmatprep.subr.mxu0 %v41
    %403 = vmatpush1.msra.mxu0 %v40
    %404 = vmatprep.subr.mxu0 %v43
    %405 = vmatpush1.msra.mxu0 %v42
    %406 = vmatprep.subr.mxu0 %v45
    %407 = vmatpush1.msra.mxu0 %v44
    %408 = vmatprep.subr.mxu0 %v47
    %409 = vmatpush1.msra.mxu0 %v46
    %410 = vmatprep.subr.mxu0 %v49
    %411 = vmatpush1.msra.mxu0 %v48
    %412 = vmatprep.subr.mxu0 %v51
    %413 = vmatpush1.msra.mxu0 %v50
    %414 = vmatprep.subr.mxu0 %v53
    %415 = vmatpush1.msra.mxu0 %v52
    %416 = vmatprep.subr.mxu0 0.0
    %417 = vmatpush1.msra.mxu0 0.0
    %418 = vmatprep.subr.mxu0 0.0
    %419 = vmatpush1.msra.mxu0 0.0
    %420 = vmatprep.subr.mxu0 0.0
    %421 = vmatpush1.msra.mxu0 0.0
    %422 = vmatprep.subr.mxu0 0.0
    %423 = vmatpush1.msra.mxu0 0.0
    %424 = vmatprep.subr.mxu0 0.0
    %425 = vmatpush1.msra.mxu0 0.0
    %426 = vmatprep.subr.mxu0 0.0
    %427 = vmatpush1.msra.mxu0 0.0
    %428 = vmatprep.subr.mxu0 0.0
    %429 = vmatpush1.msra.mxu0 0.0
    %430 = vmatprep.subr.mxu0 0.0
    %431 = vmatpush1.msra.mxu0 0.0
    %432 = vmatprep.subr.mxu0 0.0
    %433 = vmatpush1.msra.mxu0 0.0
    %434 = vmatprep.subr.mxu0 0.0
    %435 = vmatpush1.msra.mxu0 0.0
    %436 = vmatprep.subr.mxu0 0.0
    %437 = vmatpush1.msra.mxu0 0.0
    %438 = vmatprep.subr.mxu0 0.0
    %439 = vmatpush1.msra.mxu0 0.0
    %440 = vmatprep.subr.mxu0 0.0
    %441 = vmatpush1.msra.mxu0 0.0
    %442 = vmatprep.subr.mxu0 0.0
    %443 = vmatpush1.msra.mxu0 0.0
    %444 = vmatprep.subr.mxu0 0.0
    %445 = vmatpush1.msra.mxu0 0.0
    %446 = vmatprep.subr.mxu0 0.0
    %447 = vmatpush1.msra.mxu0 0.0
    %448 = vmatprep.subr.mxu0 0.0
    %449 = vmatpush1.msra.mxu0 0.0
    %450 = vmatprep.subr.mxu0 0.0
    %451 = vmatpush1.msra.mxu0 0.0
    %452 = vmatprep.subr.mxu0 0.0
    %453 = vmatpush1.msra.mxu0 0.0
    %454 = vmatprep.subr.mxu0 0.0
    %455 = vmatpush1.msra.mxu0 0.0
    %456 = vmatprep.subr.mxu0 0.0
    %457 = vmatpush1.msra.mxu0 0.0
    %458 = vmatprep.subr.mxu0 0.0
    %459 = vmatpush1.msra.mxu0 0.0
    %460 = vmatprep.subr.mxu0 0.0
    %461 = vmatpush1.msra.mxu0 0.0
    %462 = vmatprep.subr.mxu0 0.0
    %463 = vmatpush1.msra.mxu0 0.0
    %464 = vmatprep.mubr.f32.mxu0 0.0
    %465 = vmatmul.mubr.f32.gmra.mrb[0].mxu0 %v398
    %v466 = vpop.f32.mrb[0].mxu0
    %v467 = vadd.f32 0.0, %v466
    %v468 = vpop.f32.mrb[0].mxu0
    %v469 = vadd.f32 0.0, %v468
    %470 = vdwg.mxu0
    %v473 = vrot.slane %v467, 4
    %v474 = vrot.slane %v469, 4
    %v477 = vadd.f32 %v141, %v473
    %v478 = vadd.f32 %v143, %v474
    %v479 = vxor.u32 %v477, 2147483648
    %v480 = vmul.f32 %v479, 1.442695
    %v481 = vpow.pop %v480
    %v482 = vadd.f32 %v481, 1.0
    %v483 = vrcp.pop %v482
    %v484 = vmul.f32 1.0, %v483
    %v485 = vtanh.pop %v478
    %v486 = vxor.u32 %v478, 2147483648
    %v487 = vmul.f32 %v486, 1.442695
    %v488 = vpow.pop %v487
    %v489 = vadd.f32 %v488, 1.0
    %v490 = vrcp.pop %v489
    %v491 = vmul.f32 1.0, %v490
    %v493 = vrot.slane %v394, 4
    %494 = vrot.lane.b32.xlu0 %v493, 32
    %v495 = vpop.permute.xlu0 %494
    %v497 = vmul.f32 %v484, %v495
    %v498 = vmul.f32 %v484, %v485
    %500 = vrot.lane.b32.xlu0 %v498, 64
    %v501 = vpop.permute.xlu0 %500
    %v503 = vadd.f32 %v497, %v501
    %v504 = vtanh.pop %v503
    %v505 = vmul.f32 %v491, %v504
    %v506 = vld [vmem:[%s0 + $0x4] sm:$0x3]
    %v507 = vrot.slane %v386, 4
    %508 = vrot.lane.b32.xlu0 %v507, 32
    %v509 = vpop.permute.xlu0 %508
    %v511 = vsub.f32 %v505, %v509
    %v513 = vrot.slane %v511, 4
    %514 = vrot.lane.b32.xlu0 %v513, 96
    %v515 = vpop.permute.xlu0 %514
    %v517 = vmul.f32 %v506, %v515
    %v518 = vadd.f32 %v386, %v517
    %v519 = vsub.f32 %v503, %v495
    %v521 = vrot.slane %v519, 4
    %522 = vrot.lane.b32.xlu0 %v521, 96
    %v523 = vpop.permute.xlu0 %522
    %v525 = vmul.f32 %v506, %v523
    %v526 = vadd.f32 %v394, %v525
    %528 = vrot.lane.b32.xlu0 %v518, 96
    %v529 = vpop.permute.xlu0 %528
    %v530 = vsel %vm151, %v529, 0
    %532 = vmatprep.subr.mxu0 %v39
    %533 = vmatpush1.msra.mxu0 %v38
    %534 = vmatprep.subr.mxu0 %v41
    %535 = vmatpush1.msra.mxu0 %v40
    %536 = vmatprep.subr.mxu0 %v43
    %537 = vmatpush1.msra.mxu0 %v42
    %538 = vmatprep.subr.mxu0 %v45
    %539 = vmatpush1.msra.mxu0 %v44
    %540 = vmatprep.subr.mxu0 %v47
    %541 = vmatpush1.msra.mxu0 %v46
    %542 = vmatprep.subr.mxu0 %v49
    %543 = vmatpush1.msra.mxu0 %v48
    %544 = vmatprep.subr.mxu0 %v51
    %545 = vmatpush1.msra.mxu0 %v50
    %546 = vmatprep.subr.mxu0 %v53
    %547 = vmatpush1.msra.mxu0 %v52
    %548 = vmatprep.subr.mxu0 0.0
    %549 = vmatpush1.msra.mxu0 0.0
    %550 = vmatprep.subr.mxu0 0.0
    %551 = vmatpush1.msra.mxu0 0.0
    %552 = vmatprep.subr.mxu0 0.0
    %553 = vmatpush1.msra.mxu0 0.0
    %554 = vmatprep.subr.mxu0 0.0
    %555 = vmatpush1.msra.mxu0 0.0
    %556 = vmatprep.subr.mxu0 0.0
    %557 = vmatpush1.msra.mxu0 0.0
    %558 = vmatprep.subr.mxu0 0.0
    %559 = vmatpush1.msra.mxu0 0.0
    %560 = vmatprep.subr.mxu0 0.0
    %561 = vmatpush1.msra.mxu0 0.0
    %562 = vmatprep.subr.mxu0 0.0
    %563 = vmatpush1.msra.mxu0 0.0
    %564 = vmatprep.subr.mxu0 0.0
    %565 = vmatpush1.msra.mxu0 0.0
    %566 = vmatprep.subr.mxu0 0.0
    %567 = vmatpush1.msra.mxu0 0.0
    %568 = vmatprep.subr.mxu0 0.0
    %569 = vmatpush1.msra.mxu0 0.0
    %570 = vmatprep.subr.mxu0 0.0
    %571 = vmatpush1.msra.mxu0 0.0
    %572 = vmatprep.subr.mxu0 0.0
    %573 = vmatpush1.msra.mxu0 0.0
    %574 = vmatprep.subr.mxu0 0.0
    %575 = vmatpush1.msra.mxu0 0.0
    %576 = vmatprep.subr.mxu0 0.0
    %577 = vmatpush1.msra.mxu0 0.0
    %578 = vmatprep.subr.mxu0 0.0
    %579 = vmatpush1.msra.mxu0 0.0
    %580 = vmatprep.subr.mxu0 0.0
    %581 = vmatpush1.msra.mxu0 0.0
    %582 = vmatprep.subr.mxu0 0.0
    %583 = vmatpush1.msra.mxu0 0.0
    %584 = vmatprep.subr.mxu0 0.0
    %585 = vmatpush1.msra.mxu0 0.0
    %586 = vmatprep.subr.mxu0 0.0
    %587 = vmatpush1.msra.mxu0 0.0
    %588 = vmatprep.subr.mxu0 0.0
    %589 = vmatpush1.msra.mxu0 0.0
    %590 = vmatprep.subr.mxu0 0.0
    %591 = vmatpush1.msra.mxu0 0.0
    %592 = vmatprep.subr.mxu0 0.0
    %593 = vmatpush1.msra.mxu0 0.0
    %594 = vmatprep.subr.mxu0 0.0
    %595 = vmatpush1.msra.mxu0 0.0
    %596 = vmatprep.mubr.f32.mxu0 0.0
    %597 = vmatmul.mubr.f32.gmra.mrb[0].mxu0 %v530
    %v598 = vpop.f32.mrb[0].mxu0
    %v599 = vadd.f32 0.0, %v598
    %v600 = vpop.f32.mrb[0].mxu0
    %v601 = vadd.f32 0.0, %v600
    %602 = vdwg.mxu0
    %v605 = vrot.slane %v599, 2
    %v606 = vrot.slane %v601, 2
    %v609 = vadd.f32 %v141, %v605
    %v610 = vadd.f32 %v143, %v606
    %v611 = vxor.u32 %v609, 2147483648
    %v612 = vmul.f32 %v611, 1.442695
    %v613 = vpow.pop %v612
    %v614 = vadd.f32 %v613, 1.0
    %v615 = vrcp.pop %v614
    %v616 = vmul.f32 1.0, %v615
    %v617 = vtanh.pop %v610
    %v618 = vxor.u32 %v610, 2147483648
    %v619 = vmul.f32 %v618, 1.442695
    %v620 = vpow.pop %v619
    %v621 = vadd.f32 %v620, 1.0
    %v622 = vrcp.pop %v621
    %v623 = vmul.f32 1.0, %v622
    %v625 = vrot.slane %v526, 2
    %626 = vrot.lane.b32.xlu0 %v625, 32
    %v627 = vpop.permute.xlu0 %626
    %v629 = vmul.f32 %v616, %v627
    %v630 = vmul.f32 %v616, %v617
    %632 = vrot.lane.b32.xlu0 %v630, 64
    %v633 = vpop.permute.xlu0 %632
    %v635 = vadd.f32 %v629, %v633
    %v636 = vtanh.pop %v635
    %v637 = vmul.f32 %v623, %v636
    %v638 = vld [vmem:[%s0 + $0x6] sm:$0x3]
    %v639 = vrot.slane %v518, 2
    %640 = vrot.lane.b32.xlu0 %v639, 32
    %v641 = vpop.permute.xlu0 %640
    %v643 = vsub.f32 %v637, %v641
    %v645 = vrot.slane %v643, 6
    %646 = vrot.lane.b32.xlu0 %v645, 96
    %v647 = vpop.permute.xlu0 %646
    %v649 = vmul.f32 %v638, %v647
    %v650 = vadd.f32 %v518, %v649
    %v651 = vsub.f32 %v635, %v627
    %v653 = vrot.slane %v651, 6
    %654 = vrot.lane.b32.xlu0 %v653, 96
    %v655 = vpop.permute.xlu0 %654
    %v657 = vmul.f32 %v638, %v655
    %v658 = vadd.f32 %v526, %v657
    %660 = vrot.lane.b32.xlu0 %v650, 96
    %v661 = vpop.permute.xlu0 %660
    %v662 = vsel %vm151, %v661, 0
    %664 = vmatprep.subr.mxu0 %v39
    %665 = vmatpush1.msra.mxu0 %v38
    %666 = vmatprep.subr.mxu0 %v41
    %667 = vmatpush1.msra.mxu0 %v40
    %668 = vmatprep.subr.mxu0 %v43
    %669 = vmatpush1.msra.mxu0 %v42
    %670 = vmatprep.subr.mxu0 %v45
    %671 = vmatpush1.msra.mxu0 %v44
    %672 = vmatprep.subr.mxu0 %v47
    %673 = vmatpush1.msra.mxu0 %v46
    %674 = vmatprep.subr.mxu0 %v49
    %675 = vmatpush1.msra.mxu0 %v48
    %676 = vmatprep.subr.mxu0 %v51
    %677 = vmatpush1.msra.mxu0 %v50
    %678 = vmatprep.subr.mxu0 %v53
    %679 = vmatpush1.msra.mxu0 %v52
    %680 = vmatprep.subr.mxu0 0.0
    %681 = vmatpush1.msra.mxu0 0.0
    %682 = vmatprep.subr.mxu0 0.0
    %683 = vmatpush1.msra.mxu0 0.0
    %684 = vmatprep.subr.mxu0 0.0
    %685 = vmatpush1.msra.mxu0 0.0
    %686 = vmatprep.subr.mxu0 0.0
    %687 = vmatpush1.msra.mxu0 0.0
    %688 = vmatprep.subr.mxu0 0.0
    %689 = vmatpush1.msra.mxu0 0.0
    %690 = vmatprep.subr.mxu0 0.0
    %691 = vmatpush1.msra.mxu0 0.0
    %692 = vmatprep.subr.mxu0 0.0
    %693 = vmatpush1.msra.mxu0 0.0
    %694 = vmatprep.subr.mxu0 0.0
    %695 = vmatpush1.msra.mxu0 0.0
    %696 = vmatprep.subr.mxu0 0.0
    %697 = vmatpush1.msra.mxu0 0.0
    %698 = vmatprep.subr.mxu0 0.0
    %699 = vmatpush1.msra.mxu0 0.0
    %700 = vmatprep.subr.mxu0 0.0
    %701 = vmatpush1.msra.mxu0 0.0
    %702 = vmatprep.subr.mxu0 0.0
    %703 = vmatpush1.msra.mxu0 0.0
    %704 = vmatprep.subr.mxu0 0.0
    %705 = vmatpush1.msra.mxu0 0.0
    %706 = vmatprep.subr.mxu0 0.0
    %707 = vmatpush1.msra.mxu0 0.0
    %708 = vmatprep.subr.mxu0 0.0
    %709 = vmatpush1.msra.mxu0 0.0
    %710 = vmatprep.subr.mxu0 0.0
    %711 = vmatpush1.msra.mxu0 0.0
    %712 = vmatprep.subr.mxu0 0.0
    %713 = vmatpush1.msra.mxu0 0.0
    %714 = vmatprep.subr.mxu0 0.0
    %715 = vmatpush1.msra.mxu0 0.0
    %716 = vmatprep.subr.mxu0 0.0
    %717 = vmatpush1.msra.mxu0 0.0
    %718 = vmatprep.subr.mxu0 0.0
    %719 = vmatpush1.msra.mxu0 0.0
    %720 = vmatprep.subr.mxu0 0.0
    %721 = vmatpush1.msra.mxu0 0.0
    %722 = vmatprep.subr.mxu0 0.0
    %723 = vmatpush1.msra.mxu0 0.0
    %724 = vmatprep.subr.mxu0 0.0
    %725 = vmatpush1.msra.mxu0 0.0
    %726 = vmatprep.subr.mxu0 0.0
    %727 = vmatpush1.msra.mxu0 0.0
    %728 = vmatprep.mubr.f32.mxu0 0.0
    %729 = vmatmul.mubr.f32.gmra.mrb[0].mxu0 %v662
    %v730 = vpop.f32.mrb[0].mxu0
    %v731 = vadd.f32 0.0, %v730
    %v732 = vpop.f32.mrb[0].mxu0
    %v733 = vadd.f32 0.0, %v732
    %734 = vdwg.mxu0
    %v735 = vadd.f32 %v147, %v731
    %v736 = vadd.f32 %v149, %v733
    %v737 = vxor.u32 %v735, 2147483648
    %v738 = vmul.f32 %v737, 1.442695
    %v739 = vpow.pop %v738
    %v740 = vadd.f32 %v739, 1.0
    %v741 = vrcp.pop %v740
    %v742 = vmul.f32 1.0, %v741
    %v743 = vtanh.pop %v736
    %v744 = vxor.u32 %v736, 2147483648
    %v745 = vmul.f32 %v744, 1.442695
    %v746 = vpow.pop %v745
    %v747 = vadd.f32 %v746, 1.0
    %v748 = vrcp.pop %v747
    %v749 = vmul.f32 1.0, %v748
    %751 = vrot.lane.b32.xlu0 %v658, 32
    %v752 = vpop.permute.xlu0 %751
    %v754 = vmul.f32 %v742, %v752
    %v755 = vmul.f32 %v742, %v743
    %757 = vrot.lane.b32.xlu0 %v755, 64
    %v758 = vpop.permute.xlu0 %757
    %v760 = vadd.f32 %v754, %v758
    %v761 = vtanh.pop %v760
    %v762 = vmul.f32 %v749, %v761
    %v763 = vld [vmem:[%s0 + $0x8] sm:$0x3]
    %764 = vrot.lane.b32.xlu0 %v650, 32
    %v765 = vpop.permute.xlu0 %764
    %v767 = vsub.f32 %v762, %v765
    %769 = vrot.lane.b32.xlu0 %v767, 96
    %v770 = vpop.permute.xlu0 %769
    %v772 = vmul.f32 %v763, %v770
    %v773 = vadd.f32 %v650, %v772
    %v774 = vsub.f32 %v760, %v752
    %776 = vrot.lane.b32.xlu0 %v774, 96
    %v777 = vpop.permute.xlu0 %776
    %v779 = vmul.f32 %v763, %v777
    %v780 = vadd.f32 %v658, %v779
    %782 = vrot.lane.b32.xlu0 %v773, 96
    %v783 = vpop.permute.xlu0 %782
    %v784 = vsel %vm151, %v783, 0
    %786 = vmatprep.subr.mxu0 %v39
    %787 = vmatpush1.msra.mxu0 %v38
    %788 = vmatprep.subr.mxu0 %v41
    %789 = vmatpush1.msra.mxu0 %v40
    %790 = vmatprep.subr.mxu0 %v43
    %791 = vmatpush1.msra.mxu0 %v42
    %792 = vmatprep.subr.mxu0 %v45
    %793 = vmatpush1.msra.mxu0 %v44
    %794 = vmatprep.subr.mxu0 %v47
    %795 = vmatpush1.msra.mxu0 %v46
    %796 = vmatprep.subr.mxu0 %v49
    %797 = vmatpush1.msra.mxu0 %v48
    %798 = vmatprep.subr.mxu0 %v51
    %799 = vmatpush1.msra.mxu0 %v50
    %800 = vmatprep.subr.mxu0 %v53
    %801 = vmatpush1.msra.mxu0 %v52
    %802 = vmatprep.subr.mxu0 0.0
    %803 = vmatpush1.msra.mxu0 0.0
    %804 = vmatprep.subr.mxu0 0.0
    %805 = vmatpush1.msra.mxu0 0.0
    %806 = vmatprep.subr.mxu0 0.0
    %807 = vmatpush1.msra.mxu0 0.0
    %808 = vmatprep.subr.mxu0 0.0
    %809 = vmatpush1.msra.mxu0 0.0
    %810 = vmatprep.subr.mxu0 0.0
    %811 = vmatpush1.msra.mxu0 0.0
    %812 = vmatprep.subr.mxu0 0.0
    %813 = vmatpush1.msra.mxu0 0.0
    %814 = vmatprep.subr.mxu0 0.0
    %815 = vmatpush1.msra.mxu0 0.0
    %816 = vmatprep.subr.mxu0 0.0
    %817 = vmatpush1.msra.mxu0 0.0
    %818 = vmatprep.subr.mxu0 0.0
    %819 = vmatpush1.msra.mxu0 0.0
    %820 = vmatprep.subr.mxu0 0.0
    %821 = vmatpush1.msra.mxu0 0.0
    %822 = vmatprep.subr.mxu0 0.0
    %823 = vmatpush1.msra.mxu0 0.0
    %824 = vmatprep.subr.mxu0 0.0
    %825 = vmatpush1.msra.mxu0 0.0
    %826 = vmatprep.subr.mxu0 0.0
    %827 = vmatpush1.msra.mxu0 0.0
    %828 = vmatprep.subr.mxu0 0.0
    %829 = vmatpush1.msra.mxu0 0.0
    %830 = vmatprep.subr.mxu0 0.0
    %831 = vmatpush1.msra.mxu0 0.0
    %832 = vmatprep.subr.mxu0 0.0
    %833 = vmatpush1.msra.mxu0 0.0
    %834 = vmatprep.subr.mxu0 0.0
    %835 = vmatpush1.msra.mxu0 0.0
    %836 = vmatprep.subr.mxu0 0.0
    %837 = vmatpush1.msra.mxu0 0.0
    %838 = vmatprep.subr.mxu0 0.0
    %839 = vmatpush1.msra.mxu0 0.0
    %840 = vmatprep.subr.mxu0 0.0
    %841 = vmatpush1.msra.mxu0 0.0
    %842 = vmatprep.subr.mxu0 0.0
    %843 = vmatpush1.msra.mxu0 0.0
    %844 = vmatprep.subr.mxu0 0.0
    %845 = vmatpush1.msra.mxu0 0.0
    %846 = vmatprep.subr.mxu0 0.0
    %847 = vmatpush1.msra.mxu0 0.0
    %848 = vmatprep.subr.mxu0 0.0
    %849 = vmatpush1.msra.mxu0 0.0
    %850 = vmatprep.mubr.f32.mxu0 0.0
    %851 = vmatmul.mubr.f32.gmra.mrb[0].mxu0 %v784
    %v852 = vpop.f32.mrb[0].mxu0
    %v853 = vadd.f32 0.0, %v852
    %v854 = vpop.f32.mrb[0].mxu0
    %v855 = vadd.f32 0.0, %v854
    %856 = vdwg.mxu0
    %v859 = vrot.slane %v853, 6
    %v860 = vrot.slane %v855, 6
    %v863 = vadd.f32 %v147, %v859
    %v864 = vadd.f32 %v149, %v860
    %v865 = vxor.u32 %v863, 2147483648
    %v866 = vmul.f32 %v865, 1.442695
    %v867 = vpow.pop %v866
    %v868 = vadd.f32 %v867, 1.0
    %v869 = vrcp.pop %v868
    %v870 = vmul.f32 1.0, %v869
    %v871 = vtanh.pop %v864
    %v872 = vxor.u32 %v864, 2147483648
    %v873 = vmul.f32 %v872, 1.442695
    %v874 = vpow.pop %v873
    %v875 = vadd.f32 %v874, 1.0
    %v876 = vrcp.pop %v875
    %v877 = vmul.f32 1.0, %v876
    %v879 = vrot.slane %v780, 6
    %880 = vrot.lane.b32.xlu0 %v879, 32
    %v881 = vpop.permute.xlu0 %880
    %v883 = vmul.f32 %v870, %v881
    %v884 = vmul.f32 %v870, %v871
    %886 = vrot.lane.b32.xlu0 %v884, 64
    %v887 = vpop.permute.xlu0 %886
    %v889 = vadd.f32 %v883, %v887
    %v890 = vtanh.pop %v889
    %v891 = vmul.f32 %v877, %v890
    %v892 = vld [vmem:[%s0 + $0xa] sm:$0x3]
    %v893 = vrot.slane %v773, 6
    %894 = vrot.lane.b32.xlu0 %v893, 32
    %v895 = vpop.permute.xlu0 %894
    %v897 = vsub.f32 %v891, %v895
    %v899 = vrot.slane %v897, 2
    %900 = vrot.lane.b32.xlu0 %v899, 96
    %v901 = vpop.permute.xlu0 %900
    %v903 = vmul.f32 %v892, %v901
    %v904 = vadd.f32 %v773, %v903
    %v905 = vsub.f32 %v889, %v881
    %v907 = vrot.slane %v905, 2
    %908 = vrot.lane.b32.xlu0 %v907, 96
    %v909 = vpop.permute.xlu0 %908
    %v911 = vmul.f32 %v892, %v909
    %v912 = vadd.f32 %v780, %v911
    %914 = vrot.lane.b32.xlu0 %v904, 96
    %v915 = vpop.permute.xlu0 %914
    %v916 = vsel %vm151, %v915, 0
    %918 = vmatprep.subr.mxu0 %v39
    %919 = vmatpush1.msra.mxu0 %v38
    %920 = vmatprep.subr.mxu0 %v41
    %921 = vmatpush1.msra.mxu0 %v40
    %922 = vmatprep.subr.mxu0 %v43
    %923 = vmatpush1.msra.mxu0 %v42
    %924 = vmatprep.subr.mxu0 %v45
    %925 = vmatpush1.msra.mxu0 %v44
    %926 = vmatprep.subr.mxu0 %v47
    %927 = vmatpush1.msra.mxu0 %v46
    %928 = vmatprep.subr.mxu0 %v49
    %929 = vmatpush1.msra.mxu0 %v48
    %930 = vmatprep.subr.mxu0 %v51
    %931 = vmatpush1.msra.mxu0 %v50
    %932 = vmatprep.subr.mxu0 %v53
    %933 = vmatpush1.msra.mxu0 %v52
    %934 = vmatprep.subr.mxu0 0.0
    %935 = vmatpush1.msra.mxu0 0.0
    %936 = vmatprep.subr.mxu0 0.0
    %937 = vmatpush1.msra.mxu0 0.0
    %938 = vmatprep.subr.mxu0 0.0
    %939 = vmatpush1.msra.mxu0 0.0
    %940 = vmatprep.subr.mxu0 0.0
    %941 = vmatpush1.msra.mxu0 0.0
    %942 = vmatprep.subr.mxu0 0.0
    %943 = vmatpush1.msra.mxu0 0.0
    %944 = vmatprep.subr.mxu0 0.0
    %945 = vmatpush1.msra.mxu0 0.0
    %946 = vmatprep.subr.mxu0 0.0
    %947 = vmatpush1.msra.mxu0 0.0
    %948 = vmatprep.subr.mxu0 0.0
    %949 = vmatpush1.msra.mxu0 0.0
    %950 = vmatprep.subr.mxu0 0.0
    %951 = vmatpush1.msra.mxu0 0.0
    %952 = vmatprep.subr.mxu0 0.0
    %953 = vmatpush1.msra.mxu0 0.0
    %954 = vmatprep.subr.mxu0 0.0
    %955 = vmatpush1.msra.mxu0 0.0
    %956 = vmatprep.subr.mxu0 0.0
    %957 = vmatpush1.msra.mxu0 0.0
    %958 = vmatprep.subr.mxu0 0.0
    %959 = vmatpush1.msra.mxu0 0.0
    %960 = vmatprep.subr.mxu0 0.0
    %961 = vmatpush1.msra.mxu0 0.0
    %962 = vmatprep.subr.mxu0 0.0
    %963 = vmatpush1.msra.mxu0 0.0
    %964 = vmatprep.subr.mxu0 0.0
    %965 = vmatpush1.msra.mxu0 0.0
    %966 = vmatprep.subr.mxu0 0.0
    %967 = vmatpush1.msra.mxu0 0.0
    %968 = vmatprep.subr.mxu0 0.0
    %969 = vmatpush1.msra.mxu0 0.0
    %970 = vmatprep.subr.mxu0 0.0
    %971 = vmatpush1.msra.mxu0 0.0
    %972 = vmatprep.subr.mxu0 0.0
    %973 = vmatpush1.msra.mxu0 0.0
    %974 = vmatprep.subr.mxu0 0.0
    %975 = vmatpush1.msra.mxu0 0.0
    %976 = vmatprep.subr.mxu0 0.0
    %977 = vmatpush1.msra.mxu0 0.0
    %978 = vmatprep.subr.mxu0 0.0
    %979 = vmatpush1.msra.mxu0 0.0
    %980 = vmatprep.subr.mxu0 0.0
    %981 = vmatpush1.msra.mxu0 0.0
    %982 = vmatprep.mubr.f32.mxu0 0.0
    %983 = vmatmul.mubr.f32.gmra.mrb[0].mxu0 %v916
    %v984 = vpop.f32.mrb[0].mxu0
    %v985 = vadd.f32 0.0, %v984
    %v986 = vpop.f32.mrb[0].mxu0
    %v987 = vadd.f32 0.0, %v986
    %988 = vdwg.mxu0
    %v991 = vrot.slane %v985, 4
    %v992 = vrot.slane %v987, 4
    %v995 = vadd.f32 %v147, %v991
    %v996 = vadd.f32 %v149, %v992
    %v997 = vxor.u32 %v995, 2147483648
    %v998 = vmul.f32 %v997, 1.442695
    %v999 = vpow.pop %v998
    %v1000 = vadd.f32 %v999, 1.0
    %v1001 = vrcp.pop %v1000
    %v1002 = vmul.f32 1.0, %v1001
    %v1003 = vtanh.pop %v996
    %v1004 = vxor.u32 %v996, 2147483648
    %v1005 = vmul.f32 %v1004, 1.442695
    %v1006 = vpow.pop %v1005
    %v1007 = vadd.f32 %v1006, 1.0
    %v1008 = vrcp.pop %v1007
    %v1009 = vmul.f32 1.0, %v1008
    %v1011 = vrot.slane %v912, 4
    %1012 = vrot.lane.b32.xlu0 %v1011, 32
    %v1013 = vpop.permute.xlu0 %1012
    %v1015 = vmul.f32 %v1002, %v1013
    %v1016 = vmul.f32 %v1002, %v1003
    %1018 = vrot.lane.b32.xlu0 %v1016, 64
    %v1019 = vpop.permute.xlu0 %1018
    %v1021 = vadd.f32 %v1015, %v1019
    %v1022 = vtanh.pop %v1021
    %v1023 = vmul.f32 %v1009, %v1022
    %v1024 = vld [vmem:[%s0 + $0xc] sm:$0x3]
    %v1025 = vrot.slane %v904, 4
    %1026 = vrot.lane.b32.xlu0 %v1025, 32
    %v1027 = vpop.permute.xlu0 %1026
    %v1029 = vsub.f32 %v1023, %v1027
    %v1031 = vrot.slane %v1029, 4
    %1032 = vrot.lane.b32.xlu0 %v1031, 96
    %v1033 = vpop.permute.xlu0 %1032
    %v1035 = vmul.f32 %v1024, %v1033
    %v1036 = vadd.f32 %v904, %v1035
    %v1037 = vsub.f32 %v1021, %v1013
    %v1039 = vrot.slane %v1037, 4
    %1040 = vrot.lane.b32.xlu0 %v1039, 96
    %v1041 = vpop.permute.xlu0 %1040
    %v1043 = vmul.f32 %v1024, %v1041
    %v1044 = vadd.f32 %v912, %v1043
    %1046 = vrot.lane.b32.xlu0 %v1036, 96
    %v1047 = vpop.permute.xlu0 %1046
    %v1048 = vsel %vm151, %v1047, 0
    %1050 = vmatprep.subr.mxu0 %v39
    %1051 = vmatpush1.msra.mxu0 %v38
    %1052 = vmatprep.subr.mxu0 %v41
    %1053 = vmatpush1.msra.mxu0 %v40
    %1054 = vmatprep.subr.mxu0 %v43
    %1055 = vmatpush1.msra.mxu0 %v42
    %1056 = vmatprep.subr.mxu0 %v45
    %1057 = vmatpush1.msra.mxu0 %v44
    %1058 = vmatprep.subr.mxu0 %v47
    %1059 = vmatpush1.msra.mxu0 %v46
    %1060 = vmatprep.subr.mxu0 %v49
    %1061 = vmatpush1.msra.mxu0 %v48
    %1062 = vmatprep.subr.mxu0 %v51
    %1063 = vmatpush1.msra.mxu0 %v50
    %1064 = vmatprep.subr.mxu0 %v53
    %1065 = vmatpush1.msra.mxu0 %v52
    %1066 = vmatprep.subr.mxu0 0.0
    %1067 = vmatpush1.msra.mxu0 0.0
    %1068 = vmatprep.subr.mxu0 0.0
    %1069 = vmatpush1.msra.mxu0 0.0
    %1070 = vmatprep.subr.mxu0 0.0
    %1071 = vmatpush1.msra.mxu0 0.0
    %1072 = vmatprep.subr.mxu0 0.0
    %1073 = vmatpush1.msra.mxu0 0.0
    %1074 = vmatprep.subr.mxu0 0.0
    %1075 = vmatpush1.msra.mxu0 0.0
    %1076 = vmatprep.subr.mxu0 0.0
    %1077 = vmatpush1.msra.mxu0 0.0
    %1078 = vmatprep.subr.mxu0 0.0
    %1079 = vmatpush1.msra.mxu0 0.0
    %1080 = vmatprep.subr.mxu0 0.0
    %1081 = vmatpush1.msra.mxu0 0.0
    %1082 = vmatprep.subr.mxu0 0.0
    %1083 = vmatpush1.msra.mxu0 0.0
    %1084 = vmatprep.subr.mxu0 0.0
    %1085 = vmatpush1.msra.mxu0 0.0
    %1086 = vmatprep.subr.mxu0 0.0
    %1087 = vmatpush1.msra.mxu0 0.0
    %1088 = vmatprep.subr.mxu0 0.0
    %1089 = vmatpush1.msra.mxu0 0.0
    %1090 = vmatprep.subr.mxu0 0.0
    %1091 = vmatpush1.msra.mxu0 0.0
    %1092 = vmatprep.subr.mxu0 0.0
    %1093 = vmatpush1.msra.mxu0 0.0
    %1094 = vmatprep.subr.mxu0 0.0
    %1095 = vmatpush1.msra.mxu0 0.0
    %1096 = vmatprep.subr.mxu0 0.0
    %1097 = vmatpush1.msra.mxu0 0.0
    %1098 = vmatprep.subr.mxu0 0.0
    %1099 = vmatpush1.msra.mxu0 0.0
    %1100 = vmatprep.subr.mxu0 0.0
    %1101 = vmatpush1.msra.mxu0 0.0
    %1102 = vmatprep.subr.mxu0 0.0
    %1103 = vmatpush1.msra.mxu0 0.0
    %1104 = vmatprep.subr.mxu0 0.0
    %1105 = vmatpush1.msra.mxu0 0.0
    %1106 = vmatprep.subr.mxu0 0.0
    %1107 = vmatpush1.msra.mxu0 0.0
    %1108 = vmatprep.subr.mxu0 0.0
    %1109 = vmatpush1.msra.mxu0 0.0
    %1110 = vmatprep.subr.mxu0 0.0
    %1111 = vmatpush1.msra.mxu0 0.0
    %1112 = vmatprep.subr.mxu0 0.0
    %1113 = vmatpush1.msra.mxu0 0.0
    %1114 = vmatprep.mubr.f32.mxu0 0.0
    %1115 = vmatmul.mubr.f32.gmra.mrb[0].mxu0 %v1048
    %v1116 = vpop.f32.mrb[0].mxu0
    %v1117 = vadd.f32 0.0, %v1116
    %v1118 = vpop.f32.mrb[0].mxu0
    %v1119 = vadd.f32 0.0, %v1118
    %1120 = vdwg.mxu0
    %v1123 = vrot.slane %v1117, 2
    %v1124 = vrot.slane %v1119, 2
    %v1127 = vadd.f32 %v147, %v1123
    %v1128 = vadd.f32 %v149, %v1124
    %v1129 = vxor.u32 %v1127, 2147483648
    %v1130 = vmul.f32 %v1129, 1.442695
    %v1131 = vpow.pop %v1130
    %v1132 = vadd.f32 %v1131, 1.0
    %v1133 = vrcp.pop %v1132
    %v1134 = vmul.f32 1.0, %v1133
    %v1135 = vtanh.pop %v1128
    %v1136 = vxor.u32 %v1128, 2147483648
    %v1137 = vmul.f32 %v1136, 1.442695
    %v1138 = vpow.pop %v1137
    %v1139 = vadd.f32 %v1138, 1.0
    %v1140 = vrcp.pop %v1139
    %v1141 = vmul.f32 1.0, %v1140
    %v1143 = vrot.slane %v1044, 2
    %1144 = vrot.lane.b32.xlu0 %v1143, 32
    %v1145 = vpop.permute.xlu0 %1144
    %v1147 = vmul.f32 %v1134, %v1145
    %v1148 = vmul.f32 %v1134, %v1135
    %1150 = vrot.lane.b32.xlu0 %v1148, 64
    %v1151 = vpop.permute.xlu0 %1150
    %v1153 = vadd.f32 %v1147, %v1151
    %v1154 = vtanh.pop %v1153
    %v1155 = vmul.f32 %v1141, %v1154
    %v1156 = vld [vmem:[%s0 + $0xe] sm:$0x3]
    %v1157 = vrot.slane %v1036, 2
    %1158 = vrot.lane.b32.xlu0 %v1157, 32
    %v1159 = vpop.permute.xlu0 %1158
    %v1161 = vsub.f32 %v1155, %v1159
    %v1163 = vrot.slane %v1161, 6
    %1164 = vrot.lane.b32.xlu0 %v1163, 96
    %v1165 = vpop.permute.xlu0 %1164
    %v1167 = vmul.f32 %v1156, %v1165
    %v1168 = vadd.f32 %v1036, %v1167
    %v1169 = vld [vmem:[%s1 + $0x150] sm:$0xff]
    %v1170 = vld [vmem:[%s1 + $0x160] sm:$0xff]
    %v1171 = vld [vmem:[%s1 + $0x170] sm:$0xff]
    %v1172 = vld [vmem:[%s1 + $0x180] sm:$0xff]
    %v1173 = vld [vmem:[%s1 + $0x190] sm:$0xff]
    %v1174 = vld [vmem:[%s1 + $0x1a0] sm:$0xff]
    %v1175 = vld [vmem:[%s1 + $0x1b0] sm:$0xff]
    %v1176 = vld [vmem:[%s1 + $0x1c0] sm:$0xff]
    %v1177 = vld [vmem:[%s1 + $0x1d0] ss:$0 sm:$0xff]
    %v1178 = vld [vmem:[%s1 + $0x1e0] sm:$0xff]
    %v1179 = vld [vmem:[%s1 + $0x1f0] sm:$0xff]
    %v1180 = vld [vmem:[%s1 + $0x200] sm:$0xff]
    %v1181 = vld [vmem:[%s1 + $0x210] sm:$0xff]
    %v1182 = vld [vmem:[%s1 + $0x220] ss:$0 sm:$0xff]
    %1184 = vrot.lane.b32.xlu0 %v1168, 96
    %v1185 = vpop.permute.xlu0 %1184
    %v1186 = vsel %vm151, %v1185, 0
    %1188 = vmatprep.subr.mxu0 0.0
    %1189 = vmatpush1.msra.mxu0 %v1169
    %1190 = vmatprep.subr.mxu0 0.0
    %1191 = vmatpush1.msra.mxu0 %v1170
    %1192 = vmatprep.subr.mxu0 0.0
    %1193 = vmatpush1.msra.mxu0 %v1171
    %1194 = vmatprep.subr.mxu0 0.0
    %1195 = vmatpush1.msra.mxu0 %v1172
    %1196 = vmatprep.subr.mxu0 0.0
    %1197 = vmatpush1.msra.mxu0 %v1173
    %1198 = vmatprep.subr.mxu0 0.0
    %1199 = vmatpush1.msra.mxu0 %v1174
    %1200 = vmatprep.subr.mxu0 0.0
    %1201 = vmatpush1.msra.mxu0 %v1175
    %1202 = vmatprep.subr.mxu0 0.0
    %1203 = vmatpush1.msra.mxu0 %v1176
    %1204 = vmatprep.subr.mxu0 0.0
    %1205 = vmatpush1.msra.mxu0 0.0
    %1206 = vmatprep.subr.mxu0 0.0
    %1207 = vmatpush1.msra.mxu0 0.0
    %1208 = vmatprep.subr.mxu0 0.0
    %1209 = vmatpush1.msra.mxu0 0.0
    %1210 = vmatprep.subr.mxu0 0.0
    %1211 = vmatpush1.msra.mxu0 0.0
    %1212 = vmatprep.subr.mxu0 0.0
    %1213 = vmatpush1.msra.mxu0 0.0
    %1214 = vmatprep.subr.mxu0 0.0
    %1215 = vmatpush1.msra.mxu0 0.0
    %1216 = vmatprep.subr.mxu0 0.0
    %1217 = vmatpush1.msra.mxu0 0.0
    %1218 = vmatprep.subr.mxu0 0.0
    %1219 = vmatpush1.msra.mxu0 0.0
    %1220 = vmatprep.subr.mxu0 0.0
    %1221 = vmatpush1.msra.mxu0 0.0
    %1222 = vmatprep.subr.mxu0 0.0
    %1223 = vmatpush1.msra.mxu0 0.0
    %1224 = vmatprep.subr.mxu0 0.0
    %1225 = vmatpush1.msra.mxu0 0.0
    %1226 = vmatprep.subr.mxu0 0.0
    %1227 = vmatpush1.msra.mxu0 0.0
    %1228 = vmatprep.subr.mxu0 0.0
    %1229 = vmatpush1.msra.mxu0 0.0
    %1230 = vmatprep.subr.mxu0 0.0
    %1231 = vmatpush1.msra.mxu0 0.0
    %1232 = vmatprep.subr.mxu0 0.0
    %1233 = vmatpush1.msra.mxu0 0.0
    %1234 = vmatprep.subr.mxu0 0.0
    %1235 = vmatpush1.msra.mxu0 0.0
    %1236 = vmatprep.subr.mxu0 0.0
    %1237 = vmatpush1.msra.mxu0 0.0
    %1238 = vmatprep.subr.mxu0 0.0
    %1239 = vmatpush1.msra.mxu0 0.0
    %1240 = vmatprep.subr.mxu0 0.0
    %1241 = vmatpush1.msra.mxu0 0.0
    %1242 = vmatprep.subr.mxu0 0.0
    %1243 = vmatpush1.msra.mxu0 0.0
    %1244 = vmatprep.subr.mxu0 0.0
    %1245 = vmatpush1.msra.mxu0 0.0
    %1246 = vmatprep.subr.mxu0 0.0
    %1247 = vmatpush1.msra.mxu0 0.0
    %1248 = vmatprep.subr.mxu0 0.0
    %1249 = vmatpush1.msra.mxu0 0.0
    %1250 = vmatprep.subr.mxu0 0.0
    %1251 = vmatpush1.msra.mxu0 0.0
    %1252 = vmatprep.mubr.f32.mxu0 0.0
    %1253 = vmatmul.mubr.f32.gmra.mrb[0].mxu0 %v1186
    %v1254 = vpop.f32.mrb[0].mxu0
    %v1255 = vadd.f32 %v1177, %v1254
    %v1256 = vpop.f32.mrb[0].mxu0
    %1257 = vdwg.mxu0
    %v1258 = vmax.f32 %v1255, 0.0
    %vm1259 = vcmask 261120
    %v1261 = vsel %vm1259, %v1258, 0
    %1263 = vmatprep.subr.mxu0 0.0
    %1264 = vmatpush1.msra.mxu0 %v1178
    %1265 = vmatprep.subr.mxu0 0.0
    %1266 = vmatpush1.msra.mxu0 %v1179
    %1267 = vmatprep.subr.mxu0 0.0
    %1268 = vmatpush1.msra.mxu0 %v1180
    %1269 = vmatprep.subr.mxu0 0.0
    %1270 = vmatpush1.msra.mxu0 %v1181
    %1271 = vmatprep.subr.mxu0 0.0
    %1272 = vmatpush1.msra.mxu0 0.0
    %1273 = vmatprep.subr.mxu0 0.0
    %1274 = vmatpush1.msra.mxu0 0.0
    %1275 = vmatprep.subr.mxu0 0.0
    %1276 = vmatpush1.msra.mxu0 0.0
    %1277 = vmatprep.subr.mxu0 0.0
    %1278 = vmatpush1.msra.mxu0 0.0
    %1279 = vmatprep.subr.mxu0 0.0
    %1280 = vmatpush1.msra.mxu0 0.0
    %1281 = vmatprep.subr.mxu0 0.0
    %1282 = vmatpush1.msra.mxu0 0.0
    %1283 = vmatprep.subr.mxu0 0.0
    %1284 = vmatpush1.msra.mxu0 0.0
    %1285 = vmatprep.subr.mxu0 0.0
    %1286 = vmatpush1.msra.mxu0 0.0
    %1287 = vmatprep.subr.mxu0 0.0
    %1288 = vmatpush1.msra.mxu0 0.0
    %1289 = vmatprep.subr.mxu0 0.0
    %1290 = vmatpush1.msra.mxu0 0.0
    %1291 = vmatprep.subr.mxu0 0.0
    %1292 = vmatpush1.msra.mxu0 0.0
    %1293 = vmatprep.subr.mxu0 0.0
    %1294 = vmatpush1.msra.mxu0 0.0
    %1295 = vmatprep.subr.mxu0 0.0
    %1296 = vmatpush1.msra.mxu0 0.0
    %1297 = vmatprep.subr.mxu0 0.0
    %1298 = vmatpush1.msra.mxu0 0.0
    %1299 = vmatprep.subr.mxu0 0.0
    %1300 = vmatpush1.msra.mxu0 0.0
    %1301 = vmatprep.subr.mxu0 0.0
    %1302 = vmatpush1.msra.mxu0 0.0
    %1303 = vmatprep.subr.mxu0 0.0
    %1304 = vmatpush1.msra.mxu0 0.0
    %1305 = vmatprep.subr.mxu0 0.0
    %1306 = vmatpush1.msra.mxu0 0.0
    %1307 = vmatprep.subr.mxu0 0.0
    %1308 = vmatpush1.msra.mxu0 0.0
    %1309 = vmatprep.subr.mxu0 0.0
    %1310 = vmatpush1.msra.mxu0 0.0
    %1311 = vmatprep.subr.mxu0 0.0
    %1312 = vmatpush1.msra.mxu0 0.0
    %1313 = vmatprep.subr.mxu0 0.0
    %1314 = vmatpush1.msra.mxu0 0.0
    %1315 = vmatprep.subr.mxu0 0.0
    %1316 = vmatpush1.msra.mxu0 0.0
    %1317 = vmatprep.subr.mxu0 0.0
    %1318 = vmatpush1.msra.mxu0 0.0
    %1319 = vmatprep.subr.mxu0 0.0
    %1320 = vmatpush1.msra.mxu0 0.0
    %1321 = vmatprep.subr.mxu0 0.0
    %1322 = vmatpush1.msra.mxu0 0.0
    %1323 = vmatprep.subr.mxu0 0.0
    %1324 = vmatpush1.msra.mxu0 0.0
    %1325 = vmatprep.subr.mxu0 0.0
    %1326 = vmatpush1.msra.mxu0 0.0
    %1327 = vmatprep.mubr.f32.mxu0 0.0
    %1328 = vmatmul.mubr.f32.gmra.mrb[0].mxu0 %v1261
    %v1329 = vpop.f32.mrb[0].mxu0
    %v1330 = vadd.f32 %v1182, %v1329
    %v1331 = vpop.f32.mrb[0].mxu0
    %1332 = vdwg.mxu0
    %vm1333 = vcmask 58368
    %v1334 = vsel %vm1333, %v1330, -inf
    %1335 = vmax.xlane.f32.xlu0 %v1334
    %v1336 = vpop.xlane.xlu0 %1335
    %v1337 = vsub.f32 %v1330, %v1336
    %v1338 = vmul.f32 %v1337, 1.442695
    %v1339 = vpow.pop %v1338
    %v1340 = vsel %vm1333, %v1339, 0.0
    %1341 = vadd.xlane.f32.xlu0 %v1340
    %v1342 = vpop.xlane.xlu0 %1341
    %v1343 = vrcp.pop %v1342
    %v1344 = vmul.f32 %v1339, %v1343
    %1345 = vst.msk [vmem:[#allocation2] sm:$0x3] %vm1333, %v1344
    // Predicated region
    $region10: #{actor_forward.1} parent=1 // pred_check
      _
    $region11: #{actor_forward.1} parent=1 // pred_check_branch
      %1347 = sbr.rel (0) target = $region13
    $region12: #{actor_forward.1} parent=1 // pred_region
      %s1349 = ssub.s32 32, 32
      %1350 = vsyncadd [#allocation3], %s1349
      %s1352 = sshll.u32 [#allocation2], 4
      %s1353 = int_to_ptr.vmem [resolvable:$true] %s1352
      %1355 = dma.vmem_to_hbm [thread:$0]  %s1353, 32, %s2, [#allocation3]
    $region13: #{actor_forward.1} parent=1 // pred_fallthru
      _
    // Predicated region
    $region14: #{actor_forward.1} parent=1 // pred_check
      _
    $region15: #{actor_forward.1} parent=1 // pred_check_branch
      %1357 = sbr.rel (0) target = $region17
    $region16: #{actor_forward.1} parent=1 // pred_region
      %1358 = dma.done [#allocation3], 32
    $region17: #{actor_forward.1} parent=1 // pred_fallthru
      _
    %1359 = vsyncpa [#allocation3], 1

</llo_original>
